<compile_context>
chip_gen: v7x
topology: tpu7x:2x2x1
jax: 0.10.0
libtpu: 0.0.40
codegen_flags: <defaults>
</compile_context>

<pallas_src>
import jax
import jax.numpy as jnp
from jax.experimental import pallas as pl
from jax.experimental.pallas import tpu as pltpu

_HIGHEST = jax.lax.Precision.HIGHEST  # fc1/fc2 are tiny; keep f32 accuracy


def _se_kernel(x_ref, w1_ref, b1_ref, w2_ref, b2_ref, o_ref):
    # x_ref block: (B, C, HW) -- HW on the 128-lane axis, C on sublanes.
    _, _, hw = x_ref.shape

    # Squeeze: global average pool as an exact f32 lane-axis reduce.
    means = jnp.sum(x_ref[...], axis=-1) * (1.0 / hw)            # (B, C)

    # fc1 (1x1 conv): (B, C) @ (C, Cr) + bias, ReLU.
    h = jnp.dot(means, w1_ref[...],
                preferred_element_type=jnp.float32, precision=_HIGHEST)
    h = jnp.maximum(h + b1_ref[...], 0.0)                        # (B, Cr)

    # fc2 (1x1 conv): (B, Cr) @ (Cr, C) + bias, sigmoid.
    s = jnp.dot(h, w2_ref[...],
                preferred_element_type=jnp.float32, precision=_HIGHEST)
    s = jax.nn.sigmoid(s + b2_ref[...])                          # (B, C)

    # Excite: per-(image, channel) scale broadcast over the HW lane axis,
    # streamed straight from the resident input block.
    o_ref[...] = x_ref[...] * s[:, :, None]


def _target_block_bytes():
    """Per-generation x-block target: ~2 MiB on 64 MiB-VMEM parts (v7x),
    ~4 MiB on 128 MiB-VMEM parts (v5e/v6e)."""
    try:
        vmem = int(pltpu.get_tpu_info().vmem_capacity_bytes)
    except Exception:
        vmem = 64 << 20
    return (4 << 20) if vmem >= (96 << 20) else (2 << 20)


def _pick_batch_tile(n, bytes_per_image, target_bytes):
    """Batch-tile giving ~target_bytes blocks; >=2 grid steps when n >= 2
    (keeps both v7x TensorCores busy). No divisibility requirement on n."""
    bt = max(1, min(n, target_bytes // max(bytes_per_image, 1)))
    if n >= 2:
        bt = min(bt, pl.cdiv(n, 2))
    return int(max(bt, 1))


def se_module(x_nchw, w1, b1, w2, b2, *, batch_tile=None):
    """SE forward. x_nchw: (N,C,H,W) f32; w1: (Cr,C); b1: (Cr,); w2: (C,Cr); b2: (C,)."""
    n, c, h, w = x_nchw.shape
    hw = h * w
    c_r = w1.shape[0]

    # (N, C, H, W) -> (N, C, HW): merges contiguous trailing dims (no copy).
    x_r = x_nchw.reshape(n, c, hw)

    bytes_per_image = c * hw * 4
    if batch_tile is None:
        batch_tile = _pick_batch_tile(n, bytes_per_image, _target_block_bytes())
    block_bytes = batch_tile * bytes_per_image
    grid = (pl.cdiv(n, batch_tile),)   # partial last tile -> masked stores

    w1_t = jnp.transpose(w1)           # (C, Cr)
    w2_t = jnp.transpose(w2)           # (Cr, C)
    b1_row = b1.reshape(1, c_r)
    b2_row = b2.reshape(1, c)

    # x-in + out double-buffered plus tiny resident weights; leave headroom.
    vmem_limit = int(min(max(6 * block_bytes + (2 << 20), 32 << 20), 48 << 20))

    cost = pl.CostEstimate(
        flops=int(2 * n * c * hw + 4 * n * c * c_r),
        transcendentals=int(n * c),
        bytes_accessed=int(2 * n * c * hw * 4 + (2 * c * c_r + c + c_r) * 4),
    )

    out_r = pl.pallas_call(
        _se_kernel,
        out_shape=jax.ShapeDtypeStruct((n, c, hw), jnp.float32),
        grid_spec=pltpu.PrefetchScalarGridSpec(
            num_scalar_prefetch=0,
            grid=grid,
            in_specs=[
                pl.BlockSpec((batch_tile, c, hw), lambda i: (i, 0, 0)),
                pl.BlockSpec((c, c_r), lambda i: (0, 0)),
                pl.BlockSpec((1, c_r), lambda i: (0, 0)),
                pl.BlockSpec((c_r, c), lambda i: (0, 0)),
                pl.BlockSpec((1, c), lambda i: (0, 0)),
            ],
            out_specs=pl.BlockSpec((batch_tile, c, hw), lambda i: (i, 0, 0)),
        ),
        compiler_params=pltpu.CompilerParams(
            dimension_semantics=("parallel",),
            vmem_limit_bytes=vmem_limit,
        ),
        cost_estimate=cost,
    )(x_r, w1_t, b1_row, w2_t, b2_row)

    # (N, C, HW) -> (N, C, H, W): free split of the trailing dim.
    return out_r.reshape(n, c, h, w)


def _reference(x, w1, b1, w2, b2):
    # Pure-JAX reference matching the PyTorch SEModule semantics.
    mean = jnp.mean(x, axis=(2, 3), keepdims=True)                     # (N, C, 1, 1)
    hcn = jnp.einsum("rc,ncij->nrij", w1, mean, precision=_HIGHEST)
    hcn = jnp.maximum(hcn + b1[None, :, None, None], 0.0)
    s = jnp.einsum("cr,nrij->ncij", w2, hcn, precision=_HIGHEST)
    s = jax.nn.sigmoid(s + b2[None, :, None, None])
    return x * s


if __name__ == "__main__":
    # Small shapes consistent with SEModule(channels=128, reduction=16).
    N, C, H, W = 2, 128, 8, 8
    reduction = 16
    C_r = C // reduction

    key = jax.random.PRNGKey(0)
    k_x, k_w1, k_b1, k_w2, k_b2 = jax.random.split(key, 5)

    x = jax.random.normal(k_x, (N, C, H, W), dtype=jnp.float32)
    # 1x1 conv weights squeezed to 2-D matrices (fc1.weight, fc2.weight).
    w1 = jax.random.normal(k_w1, (C_r, C), dtype=jnp.float32) * 0.1
    b1 = jax.random.normal(k_b1, (C_r,), dtype=jnp.float32) * 0.1
    w2 = jax.random.normal(k_w2, (C, C_r), dtype=jnp.float32) * 0.1
    b2 = jax.random.normal(k_b2, (C,), dtype=jnp.float32) * 0.1

    out = jax.jit(se_module)(x, w1, b1, w2, b2)
    out = jax.block_until_ready(out)

    ref = _reference(x, w1, b1, w2, b2)
    assert out.shape == (N, C, H, W)
    assert jnp.allclose(out, ref, atol=1e-5, rtol=1e-5), "mismatch vs JAX reference"

    print("KERNEL_OK")
</pallas_src>

<mosaic_0001>
module attributes {stable_mosaic.version = 11 : i64} {
  func.func @_se_kernel(%arg0: i32, %arg1: memref<1x128x64xf32, #tpu.memory_space<vmem>>, %arg2: memref<128x8xf32, #tpu.memory_space<vmem>>, %arg3: memref<1x8xf32, #tpu.memory_space<vmem>>, %arg4: memref<8x128xf32, #tpu.memory_space<vmem>>, %arg5: memref<1x128xf32, #tpu.memory_space<vmem>>, %arg6: memref<1x128x64xf32, #tpu.memory_space<vmem>>) attributes {dimension_semantics = [#tpu.dimension_semantics<parallel>], iteration_bounds = array<i64: 2>, scalar_prefetch = 0 : i64, scratch_operands = 0 : i64, tpu.core_type = #tpu.core_type<tc>, window_params = [{transform_indices = @transform_0, window_bounds = array<i64: 1, 128, 64>}, {pipeline_mode = #tpu.pipeline_mode<synchronous>, transform_indices = @transform_1, window_bounds = array<i64: 128, 8>}, {pipeline_mode = #tpu.pipeline_mode<synchronous>, transform_indices = @transform_2, window_bounds = array<i64: 1, 8>}, {pipeline_mode = #tpu.pipeline_mode<synchronous>, transform_indices = @transform_3, window_bounds = array<i64: 8, 128>}, {pipeline_mode = #tpu.pipeline_mode<synchronous>, transform_indices = @transform_4, window_bounds = array<i64: 1, 128>}, {transform_indices = @transform_5, window_bounds = array<i64: 1, 128, 64>}]} {
    %c0 = arith.constant 0 : index
    %c0_0 = arith.constant 0 : index
    %c0_1 = arith.constant 0 : index
    %0 = vector.load %arg1[%c0, %c0_0, %c0_1] : memref<1x128x64xf32, #tpu.memory_space<vmem>>, vector<1x128x64xf32>
    %cst = arith.constant dense<0.000000e+00> : vector<1x128xf32>
    %1 = vector.multi_reduction <add>, %0, %cst [2] : vector<1x128x64xf32> to vector<1x128xf32>
    %cst_2 = arith.constant 1.562500e-02 : f32
    %2 = vector.broadcast %cst_2 : f32 to vector<1x128xf32>
    %3 = arith.mulf %1, %2 : vector<1x128xf32>
    %c0_3 = arith.constant 0 : index
    %c0_4 = arith.constant 0 : index
    %4 = vector.load %arg2[%c0_3, %c0_4] : memref<128x8xf32, #tpu.memory_space<vmem>>, vector<128x8xf32>
    %cst_5 = arith.constant dense<0.000000e+00> : vector<1x8xf32>
    %5 = tpu.matmul %3, %4, %cst_5 {dimension_numbers = #tpu.dot_dimension_numbers<[1], [0], [0], [1], [0, 0, 1, 1], [], []>, precision = #tpu.contract_precision<fp32>} : vector<1x128xf32>, vector<128x8xf32>, vector<1x8xf32> -> vector<1x8xf32>
    %c0_6 = arith.constant 0 : index
    %c0_7 = arith.constant 0 : index
    %6 = vector.load %arg3[%c0_6, %c0_7] : memref<1x8xf32, #tpu.memory_space<vmem>>, vector<1x8xf32>
    %7 = arith.addf %5, %6 : vector<1x8xf32>
    %cst_8 = arith.constant 0.000000e+00 : f32
    %8 = vector.broadcast %cst_8 : f32 to vector<1x8xf32>
    %9 = arith.maximumf %7, %8 : vector<1x8xf32>
    %c0_9 = arith.constant 0 : index
    %c0_10 = arith.constant 0 : index
    %10 = vector.load %arg4[%c0_9, %c0_10] : memref<8x128xf32, #tpu.memory_space<vmem>>, vector<8x128xf32>
    %cst_11 = arith.constant dense<0.000000e+00> : vector<1x128xf32>
    %11 = tpu.matmul %9, %10, %cst_11 {dimension_numbers = #tpu.dot_dimension_numbers<[1], [0], [0], [1], [0, 0, 1, 1], [], []>, precision = #tpu.contract_precision<fp32>} : vector<1x8xf32>, vector<8x128xf32>, vector<1x128xf32> -> vector<1x128xf32>
    %c0_12 = arith.constant 0 : index
    %c0_13 = arith.constant 0 : index
    %12 = vector.load %arg5[%c0_12, %c0_13] : memref<1x128xf32, #tpu.memory_space<vmem>>, vector<1x128xf32>
    %13 = arith.addf %11, %12 : vector<1x128xf32>
    %14 = arith.negf %13 : vector<1x128xf32>
    %15 = math.exp %14 : vector<1x128xf32>
    %cst_14 = arith.constant 1.000000e+00 : f32
    %16 = vector.broadcast %cst_14 : f32 to vector<1x128xf32>
    %17 = arith.addf %16, %15 : vector<1x128xf32>
    %18 = arith.divf %16, %17 : vector<1x128xf32>
    %c0_15 = arith.constant 0 : index
    %c0_16 = arith.constant 0 : index
    %c0_17 = arith.constant 0 : index
    %19 = vector.load %arg1[%c0_15, %c0_16, %c0_17] : memref<1x128x64xf32, #tpu.memory_space<vmem>>, vector<1x128x64xf32>
    %20 = vector.shape_cast %18 : vector<1x128xf32> to vector<1x128x1xf32>
    %21 = vector.broadcast %20 : vector<1x128x1xf32> to vector<1x128x64xf32>
    %22 = arith.mulf %19, %21 : vector<1x128x64xf32>
    %c0_18 = arith.constant 0 : index
    %c0_19 = arith.constant 0 : index
    %c0_20 = arith.constant 0 : index
    %23 = vector.load %arg6[%c0_18, %c0_19, %c0_20] : memref<1x128x64xf32, #tpu.memory_space<vmem>>, vector<1x128x64xf32>
    tpu.vector_store %arg6[%c0_18, %c0_19, %c0_20], %22 {strides = array<i32>} : memref<1x128x64xf32, #tpu.memory_space<vmem>>, vector<1x128x64xf32>,
    return
  }
  func.func @transform_0(%arg0: i32) -> (i32, i32, i32) {
    %c0_i32 = arith.constant 0 : i32
    %c0_i32_0 = arith.constant 0 : i32
    %c0_i32_1 = arith.constant 0 : i32
    return %arg0, %c0_i32, %c0_i32_0 : i32, i32, i32
  }
  func.func @transform_1(%arg0: i32) -> (i32, i32) {
    %c0_i32 = arith.constant 0 : i32
    %c0_i32_0 = arith.constant 0 : i32
    %c0_i32_1 = arith.constant 0 : i32
    return %c0_i32, %c0_i32_0 : i32, i32
  }
  func.func @transform_2(%arg0: i32) -> (i32, i32) {
    %c0_i32 = arith.constant 0 : i32
    %c0_i32_0 = arith.constant 0 : i32
    %c0_i32_1 = arith.constant 0 : i32
    return %c0_i32, %c0_i32_0 : i32, i32
  }
  func.func @transform_3(%arg0: i32) -> (i32, i32) {
    %c0_i32 = arith.constant 0 : i32
    %c0_i32_0 = arith.constant 0 : i32
    %c0_i32_1 = arith.constant 0 : i32
    return %c0_i32, %c0_i32_0 : i32, i32
  }
  func.func @transform_4(%arg0: i32) -> (i32, i32) {
    %c0_i32 = arith.constant 0 : i32
    %c0_i32_0 = arith.constant 0 : i32
    %c0_i32_1 = arith.constant 0 : i32
    return %c0_i32, %c0_i32_0 : i32, i32
  }
  func.func @transform_5(%arg0: i32) -> (i32, i32, i32) {
    %c0_i32 = arith.constant 0 : i32
    %c0_i32_0 = arith.constant 0 : i32
    %c0_i32_1 = arith.constant 0 : i32
    return %arg0, %c0_i32, %c0_i32_0 : i32, i32, i32
  }
}

</mosaic_0001>

<llo_original>
// kernel: se_module.1
$region0: #{se_module.1}
  #allocation0 [shape = 'u32[]', space=smem, size = 0x4, offset = 0x4, fixed_abs, tag = 'smem constant byte address 0x4 - core index']
  #allocation1 [shape = 'u32[144,128]{1,0:T(1,128)}', space=vmem, size = 0x12000, scoped, tag = 'internal scratch']
  %s0 = inlined_call_operand.vmem [shape: f32[2,128,64], index: 0, kind: input, shape index: {}]
  %s1 = inlined_call_operand.vmem [shape: f32[128,8], index: 1, kind: input, shape index: {}]
  %s2 = inlined_call_operand.vmem [shape: f32[1,8], index: 2, kind: input, shape index: {}]
  %s3 = inlined_call_operand.vmem [shape: f32[8,128], index: 3, kind: input, shape index: {}]
  %s4 = inlined_call_operand.vmem [shape: f32[1,128], index: 4, kind: input, shape index: {}]
  %s5 = inlined_call_operand.vmem [shape: f32[2,128,64], index: 5, kind: output, shape index: {}]
  %s6 = sld [smem:[#allocation0]]
  $region53: #{se_module.1} parent=0
    _
  %s8 = ssub.s32 1, %s6
  %s9 = scalar_select 0, %s8, %s6
  loop: start=0, step=1, limit=4
  $region2: #{se_module.1} parent=0 // loop_pre_header
    _
  $region3: #{se_module.1} parent=0 // loop_header
    %s11 = sphi 0, %s15
    %p12 = scmp.ge.s32.totalorder %s11, 4
    %s21 = sphi 0, %s23
    %s24 = sphi 0, %s21
    %s25 = sphi 0, %s24
    %s41 = sphi 0, %s25
    %s45 = sphi 0, %s45
    %s47 = sphi 0, %s45
    %s48 = sphi 0, %s47
    %s62 = sphi 0, %s48
    %s66 = sphi 0, %s66
    %s68 = sphi 0, %s66
    %s69 = sphi 0, %s68
    %s83 = sphi 0, %s69
    %s87 = sphi 0, %s87
    %s89 = sphi 0, %s87
    %s90 = sphi 0, %s89
    %s104 = sphi 0, %s90
    %s108 = sphi 0, %s108
    %s110 = sphi 0, %s108
    %s111 = sphi 0, %s110
    %s125 = sphi 0, %s111
    %s131 = sphi 0, %s133
    %s134 = sphi 0, %s131
    %s135 = sphi 0, %s134
    %s151 = sphi 0, %s135
  $region4: #{se_module.1} parent=0 // loop_header_branch
    %14 = sbr.rel (%p12) target = $region8
  $region5: #{se_module.1} parent=0 // loop_body
    %s16 = ssub.s32 %s11, 1
    %s17 = ssub.s32 %s11, 2
    %s18 = sadd.s32 %s11, 1
    %s19 = ssub.s32 %s11, %s18
    %p20 = scmp.eq.s32.totalorder %s19, 0
    %s22 = sadd.s32 %s21, 1
    %s23 = scalar_select %p20, %s21, %s22
    %p26 = pneg %p20
    %p27 = scmp.eq.s32.totalorder %s11, 1
    %p28 = por %p26, %p27
    %p29 = scmp.ne.s32.totalorder %s21, %s24
    %p30 = scmp.eq.s32.totalorder %s11, 0
    %p31 = por %p29, %p30
    %p32 = scmp.ne.s32.totalorder %s21, %s24
    %p33 = scmp.eq.s32.totalorder %s16, 1
    %p34 = por %p32, %p33
    %p35 = scmp.ne.s32.totalorder %s24, %s25
    %p36 = scmp.eq.s32.totalorder %s16, 0
    %p37 = por %p35, %p36
    %p38 = scmp.ne.s32.totalorder %s24, %s25
    %p39 = scmp.eq.s32.totalorder %s17, 1
    %p40 = por %p38, %p39
    %p42 = scmp.ne.s32.totalorder %s25, %s41
    %p43 = scmp.eq.s32.totalorder %s17, 0
    %p44 = por %p42, %p43
    %s46 = sadd.s32 %s45, 1
    %p49 = scmp.eq.s32.totalorder %s11, 1
    %p50 = scmp.ne.s32.totalorder %s45, %s47
    %p51 = scmp.eq.s32.totalorder %s11, 0
    %p52 = por %p50, %p51
    %p53 = scmp.ne.s32.totalorder %s45, %s47
    %p54 = scmp.eq.s32.totalorder %s16, 1
    %p55 = por %p53, %p54
    %p56 = scmp.ne.s32.totalorder %s47, %s48
    %p57 = scmp.eq.s32.totalorder %s16, 0
    %p58 = por %p56, %p57
    %p59 = scmp.ne.s32.totalorder %s47, %s48
    %p60 = scmp.eq.s32.totalorder %s17, 1
    %p61 = por %p59, %p60
    %p63 = scmp.ne.s32.totalorder %s48, %s62
    %p64 = scmp.eq.s32.totalorder %s17, 0
    %p65 = por %p63, %p64
    %s67 = sadd.s32 %s66, 1
    %p70 = scmp.eq.s32.totalorder %s11, 1
    %p71 = scmp.ne.s32.totalorder %s66, %s68
    %p72 = scmp.eq.s32.totalorder %s11, 0
    %p73 = por %p71, %p72
    %p74 = scmp.ne.s32.totalorder %s66, %s68
    %p75 = scmp.eq.s32.totalorder %s16, 1
    %p76 = por %p74, %p75
    %p77 = scmp.ne.s32.totalorder %s68, %s69
    %p78 = scmp.eq.s32.totalorder %s16, 0
    %p79 = por %p77, %p78
    %p80 = scmp.ne.s32.totalorder %s68, %s69
    %p81 = scmp.eq.s32.totalorder %s17, 1
    %p82 = por %p80, %p81
    %p84 = scmp.ne.s32.totalorder %s69, %s83
    %p85 = scmp.eq.s32.totalorder %s17, 0
    %p86 = por %p84, %p85
    %s88 = sadd.s32 %s87, 1
    %p91 = scmp.eq.s32.totalorder %s11, 1
    %p92 = scmp.ne.s32.totalorder %s87, %s89
    %p93 = scmp.eq.s32.totalorder %s11, 0
    %p94 = por %p92, %p93
    %p95 = scmp.ne.s32.totalorder %s87, %s89
    %p96 = scmp.eq.s32.totalorder %s16, 1
    %p97 = por %p95, %p96
    %p98 = scmp.ne.s32.totalorder %s89, %s90
    %p99 = scmp.eq.s32.totalorder %s16, 0
    %p100 = por %p98, %p99
    %p101 = scmp.ne.s32.totalorder %s89, %s90
    %p102 = scmp.eq.s32.totalorder %s17, 1
    %p103 = por %p101, %p102
    %p105 = scmp.ne.s32.totalorder %s90, %s104
    %p106 = scmp.eq.s32.totalorder %s17, 0
    %p107 = por %p105, %p106
    %s109 = sadd.s32 %s108, 1
    %p112 = scmp.eq.s32.totalorder %s11, 1
    %p113 = scmp.ne.s32.totalorder %s108, %s110
    %p114 = scmp.eq.s32.totalorder %s11, 0
    %p115 = por %p113, %p114
    %p116 = scmp.ne.s32.totalorder %s108, %s110
    %p117 = scmp.eq.s32.totalorder %s16, 1
    %p118 = por %p116, %p117
    %p119 = scmp.ne.s32.totalorder %s110, %s111
    %p120 = scmp.eq.s32.totalorder %s16, 0
    %p121 = por %p119, %p120
    %p122 = scmp.ne.s32.totalorder %s110, %s111
    %p123 = scmp.eq.s32.totalorder %s17, 1
    %p124 = por %p122, %p123
    %p126 = scmp.ne.s32.totalorder %s111, %s125
    %p127 = scmp.eq.s32.totalorder %s17, 0
    %p128 = por %p126, %p127
    %s129 = ssub.s32 %s11, %s18
    %p130 = scmp.eq.s32.totalorder %s129, 0
    %s132 = sadd.s32 %s131, 1
    %s133 = scalar_select %p130, %s131, %s132
    %p136 = pneg %p130
    %p137 = scmp.eq.s32.totalorder %s11, 1
    %p138 = por %p136, %p137
    %p139 = scmp.ne.s32.totalorder %s131, %s134
    %p140 = scmp.eq.s32.totalorder %s11, 0
    %p141 = por %p139, %p140
    %p142 = scmp.ne.s32.totalorder %s131, %s134
    %p143 = scmp.eq.s32.totalorder %s16, 1
    %p144 = por %p142, %p143
    %p145 = scmp.ne.s32.totalorder %s134, %s135
    %p146 = scmp.eq.s32.totalorder %s16, 0
    %p147 = por %p145, %p146
    %p148 = scmp.ne.s32.totalorder %s134, %s135
    %p149 = scmp.eq.s32.totalorder %s17, 1
    %p150 = por %p148, %p149
    %p152 = scmp.ne.s32.totalorder %s135, %s151
    %p153 = scmp.eq.s32.totalorder %s17, 0
    %p154 = por %p152, %p153
    %p155 = scmp.le.s32.totalorder 1, %s11
    %p156 = scmp.lt.s32.totalorder %s11, 3
    %p157 = pnand %p155, %p156
    %p158 = pneg %p157
    // Predicated region
    $region9: #{se_module.1} parent=5 // pred_check
      _
    $region10: #{se_module.1} parent=5 // pred_check_branch
      %160 = sbr.rel (%p157) target = $region12
    $region11: #{se_module.1} parent=5 // pred_region
      %s161 = ssub.s32 %s11, 1
      // Predicated region
      $region13: #{se_module.1} parent=11 // pred_check
        %p162 = pneg %p58
      $region14: #{se_module.1} parent=11 // pred_check_branch
        %164 = sbr.rel (%p162) target = $region16
      $region15: #{se_module.1} parent=11 // pred_region
        _
      $region16: #{se_module.1} parent=11 // pred_fallthru
        _
      // Predicated region
      $region17: #{se_module.1} parent=11 // pred_check
        %p165 = pneg %p79
      $region18: #{se_module.1} parent=11 // pred_check_branch
        %167 = sbr.rel (%p165) target = $region20
      $region19: #{se_module.1} parent=11 // pred_region
        _
      $region20: #{se_module.1} parent=11 // pred_fallthru
        _
      // Predicated region
      $region21: #{se_module.1} parent=11 // pred_check
        %p168 = pneg %p100
      $region22: #{se_module.1} parent=11 // pred_check_branch
        %170 = sbr.rel (%p168) target = $region24
      $region23: #{se_module.1} parent=11 // pred_region
        _
      $region24: #{se_module.1} parent=11 // pred_fallthru
        _
      // Predicated region
      $region25: #{se_module.1} parent=11 // pred_check
        %p171 = pneg %p121
      $region26: #{se_module.1} parent=11 // pred_check_branch
        %173 = sbr.rel (%p171) target = $region28
      $region27: #{se_module.1} parent=11 // pred_region
        _
      $region28: #{se_module.1} parent=11 // pred_fallthru
        _
    $region12: #{se_module.1} parent=5 // pred_fallthru
      _
    %p174 = scmp.lt.s32.totalorder %s11, 2
    // Predicated region
    $region29: #{se_module.1} parent=5 // pred_check
      %p175 = pneg %p174
    $region30: #{se_module.1} parent=5 // pred_check_branch
      %177 = sbr.rel (%p175) target = $region32
    $region31: #{se_module.1} parent=5 // pred_region
      // Predicated region
      $region33: #{se_module.1} parent=31 // pred_check
        %p178 = pneg %p31
      $region34: #{se_module.1} parent=31 // pred_check_branch
        %180 = sbr.rel (%p178) target = $region36
      $region35: #{se_module.1} parent=31 // pred_region
        %p181 = scmp.lt.s32.totalorder %s11, 1
        %s182 = scalar_select %p181, %s11, 1
        %s183 = smul.addr %s182, 16
        %s184 = smul.addr %s183, 8
        %s185 = scalar_lea.vmem %s0, %s184
      $region36: #{se_module.1} parent=31 // pred_fallthru
        _
    $region32: #{se_module.1} parent=5 // pred_fallthru
      _
    %p186 = scmp.le.s32.totalorder 1, %s11
    %p187 = scmp.lt.s32.totalorder %s11, 3
    %p188 = pnand %p186, %p187
    %p189 = pneg %p188
    // Predicated region
    $region37: #{se_module.1} parent=5 // pred_check
      _
    $region38: #{se_module.1} parent=5 // pred_check_branch
      %191 = sbr.rel (%p188) target = $region40
    $region39: #{se_module.1} parent=5 // pred_region
      %s192 = ssub.s32 %s11, 1
      %p193 = scmp.lt.s32.totalorder %s16, 1
      %s194 = scalar_select %p193, %s16, 1
      %s195 = smul.addr %s194, 16
      %s196 = smul.addr %s195, 8
      %s197 = scalar_lea.vmem %s0, %s196
      %p198 = pneg %p37
      %p199 = pneg %p34
      %p200 = pneg %p58
      %p201 = pneg %p55
      %p202 = pneg %p79
      %p203 = pneg %p76
      %p204 = pneg %p100
      %p205 = pneg %p97
      %p206 = pneg %p121
      %p207 = pneg %p118
      %p208 = pneg %p147
      %p209 = pneg %p144
      %p210 = scmp.lt.s32.totalorder %s16, 1
      %s211 = scalar_select %p210, %s16, 1
      %s212 = smul.addr %s211, 16
      %s213 = smul.addr %s212, 8
      %s214 = scalar_lea.vmem %s5, %s213
      %p215 = scmp.lt.s32.totalorder %s16, 1
      %s216 = scalar_select %p215, %s16, 1
      %s217 = smul.addr %s216, 16
      %s218 = smul.addr %s217, 8
      %s219 = scalar_lea.vmem %s0, %s218
      %p220 = scmp.lt.s32.totalorder %s16, 1
      %s221 = scalar_select %p220, %s16, 1
      %s222 = smul.addr %s221, 16
      %s223 = smul.addr %s222, 8
      %s224 = scalar_lea.vmem %s5, %s223
      %v225 = vld [vmem:[%s219] sm:$0xff]
      %v226 = vld [vmem:[%s219 + $0x8] sm:$0xff]
      %v227 = vld [vmem:[%s219 + $0x10] sm:$0xff]
      %v228 = vld [vmem:[%s219 + $0x18] sm:$0xff]
      %v229 = vld [vmem:[%s219 + $0x20] sm:$0xff]
      %v230 = vld [vmem:[%s219 + $0x28] sm:$0xff]
      %v231 = vld [vmem:[%s219 + $0x30] sm:$0xff]
      %v232 = vld [vmem:[%s219 + $0x38] sm:$0xff]
      %v233 = vld [vmem:[%s219 + $0x40] sm:$0xff]
      %v234 = vld [vmem:[%s219 + $0x48] sm:$0xff]
      %v235 = vld [vmem:[%s219 + $0x50] sm:$0xff]
      %v236 = vld [vmem:[%s219 + $0x58] sm:$0xff]
      %v237 = vld [vmem:[%s219 + $0x60] sm:$0xff]
      %v238 = vld [vmem:[%s219 + $0x68] sm:$0xff]
      %v239 = vld [vmem:[%s219 + $0x70] sm:$0xff]
      %v240 = vld [vmem:[%s219 + $0x78] sm:$0xff]
      %vm241 = vcmask 523264
      %v242 = vsel %vm241, %v225, 0.0
      %243 = vadd.xlane.f32.xlu0 %v242
      %v244 = vpop.xlane.xlu0 %243
      %v245 = vsel %vm241, %v226, 0.0
      %246 = vadd.xlane.f32.xlu0 %v245
      %v247 = vpop.xlane.xlu0 %246
      %v248 = vsel %vm241, %v227, 0.0
      %249 = vadd.xlane.f32.xlu0 %v248
      %v250 = vpop.xlane.xlu0 %249
      %v251 = vsel %vm241, %v228, 0.0
      %252 = vadd.xlane.f32.xlu0 %v251
      %v253 = vpop.xlane.xlu0 %252
      %v254 = vsel %vm241, %v229, 0.0
      %255 = vadd.xlane.f32.xlu0 %v254
      %v256 = vpop.xlane.xlu0 %255
      %v257 = vsel %vm241, %v230, 0.0
      %258 = vadd.xlane.f32.xlu0 %v257
      %v259 = vpop.xlane.xlu0 %258
      %v260 = vsel %vm241, %v231, 0.0
      %261 = vadd.xlane.f32.xlu0 %v260
      %v262 = vpop.xlane.xlu0 %261
      %v263 = vsel %vm241, %v232, 0.0
      %264 = vadd.xlane.f32.xlu0 %v263
      %v265 = vpop.xlane.xlu0 %264
      %v266 = vsel %vm241, %v233, 0.0
      %267 = vadd.xlane.f32.xlu0 %v266
      %v268 = vpop.xlane.xlu0 %267
      %v269 = vsel %vm241, %v234, 0.0
      %270 = vadd.xlane.f32.xlu0 %v269
      %v271 = vpop.xlane.xlu0 %270
      %v272 = vsel %vm241, %v235, 0.0
      %273 = vadd.xlane.f32.xlu0 %v272
      %v274 = vpop.xlane.xlu0 %273
      %v275 = vsel %vm241, %v236, 0.0
      %276 = vadd.xlane.f32.xlu0 %v275
      %v277 = vpop.xlane.xlu0 %276
      %v278 = vsel %vm241, %v237, 0.0
      %279 = vadd.xlane.f32.xlu0 %v278
      %v280 = vpop.xlane.xlu0 %279
      %v281 = vsel %vm241, %v238, 0.0
      %282 = vadd.xlane.f32.xlu0 %v281
      %v283 = vpop.xlane.xlu0 %282
      %v284 = vsel %vm241, %v239, 0.0
      %285 = vadd.xlane.f32.xlu0 %v284
      %v286 = vpop.xlane.xlu0 %285
      %v287 = vsel %vm241, %v240, 0.0
      %288 = vadd.xlane.f32.xlu0 %v287
      %v289 = vpop.xlane.xlu0 %288
      %v290 = vmul.f32 %v244, 0.015625
      %v291 = vmul.f32 %v247, 0.015625
      %v292 = vmul.f32 %v250, 0.015625
      %v293 = vmul.f32 %v253, 0.015625
      %v294 = vmul.f32 %v256, 0.015625
      %v295 = vmul.f32 %v259, 0.015625
      %v296 = vmul.f32 %v262, 0.015625
      %v297 = vmul.f32 %v265, 0.015625
      %v298 = vmul.f32 %v268, 0.015625
      %v299 = vmul.f32 %v271, 0.015625
      %v300 = vmul.f32 %v274, 0.015625
      %v301 = vmul.f32 %v277, 0.015625
      %v302 = vmul.f32 %v280, 0.015625
      %v303 = vmul.f32 %v283, 0.015625
      %v304 = vmul.f32 %v286, 0.015625
      %v305 = vmul.f32 %v289, 0.015625
      %v306 = vld [vmem:[%s1] sm:$0xff]
      %v307 = vld [vmem:[%s1 + $0x8] sm:$0xff]
      %v308 = vld [vmem:[%s1 + $0x10] sm:$0xff]
      %v309 = vld [vmem:[%s1 + $0x18] sm:$0xff]
      %v310 = vld [vmem:[%s1 + $0x20] sm:$0xff]
      %v311 = vld [vmem:[%s1 + $0x28] sm:$0xff]
      %v312 = vld [vmem:[%s1 + $0x30] sm:$0xff]
      %v313 = vld [vmem:[%s1 + $0x38] sm:$0xff]
      %v314 = vld [vmem:[%s1 + $0x40] sm:$0xff]
      %v315 = vld [vmem:[%s1 + $0x48] sm:$0xff]
      %v316 = vld [vmem:[%s1 + $0x50] sm:$0xff]
      %v317 = vld [vmem:[%s1 + $0x58] sm:$0xff]
      %v318 = vld [vmem:[%s1 + $0x60] sm:$0xff]
      %v319 = vld [vmem:[%s1 + $0x68] sm:$0xff]
      %v320 = vld [vmem:[%s1 + $0x70] sm:$0xff]
      %v321 = vld [vmem:[%s1 + $0x78] sm:$0xff]
      %v322 = vld [vmem:[%s2] sm:$0x1]
      %v339 = vlaneseq
      %v340 = vand.u32 %v339, 127
      %v341 = vlaneseq
      %v342 = vshrl.u32 %v341, 7
      %v343 = vsub.s32 %v340, %v342
      %v344 = vrot.slane %v290, %v343
      %v345 = vadd.s32 %v340, 4294967288
      %v346 = vlaneseq
      %v347 = vshrl.u32 %v346, 7
      %v348 = vsub.s32 %v345, %v347
      %v349 = vrot.slane %v291, %v348
      %vm350 = vcmask 130112
      %v351 = vsel %vm350, %v349, %v344
      %v352 = vadd.s32 %v340, 4294967280
      %v353 = vlaneseq
      %v354 = vshrl.u32 %v353, 7
      %v355 = vsub.s32 %v352, %v354
      %v356 = vrot.slane %v292, %v355
      %vm357 = vcmask 195712
      %v358 = vsel %vm357, %v356, %v351
      %v359 = vadd.s32 %v340, 4294967272
      %v360 = vlaneseq
      %v361 = vshrl.u32 %v360, 7
      %v362 = vsub.s32 %v359, %v361
      %v363 = vrot.slane %v293, %v362
      %vm364 = vcmask 261312
      %v365 = vsel %vm364, %v363, %v358
      %v366 = vadd.s32 %v340, 4294967264
      %v367 = vlaneseq
      %v368 = vshrl.u32 %v367, 7
      %v369 = vsub.s32 %v366, %v368
      %v370 = vrot.slane %v294, %v369
      %vm371 = vcmask 326912
      %v372 = vsel %vm371, %v370, %v365
      %v373 = vadd.s32 %v340, 4294967256
      %v374 = vlaneseq
      %v375 = vshrl.u32 %v374, 7
      %v376 = vsub.s32 %v373, %v375
      %v377 = vrot.slane %v295, %v376
      %vm378 = vcmask 392512
      %v379 = vsel %vm378, %v377, %v372
      %v380 = vadd.s32 %v340, 4294967248
      %v381 = vlaneseq
      %v382 = vshrl.u32 %v381, 7
      %v383 = vsub.s32 %v380, %v382
      %v384 = vrot.slane %v296, %v383
      %vm385 = vcmask 458112
      %v386 = vsel %vm385, %v384, %v379
      %v387 = vadd.s32 %v340, 4294967240
      %v388 = vlaneseq
      %v389 = vshrl.u32 %v388, 7
      %v390 = vsub.s32 %v387, %v389
      %v391 = vrot.slane %v297, %v390
      %vm392 = vcmask 523712
      %v393 = vsel %vm392, %v391, %v386
      %v394 = vadd.s32 %v340, 4294967232
      %v395 = vlaneseq
      %v396 = vshrl.u32 %v395, 7
      %v397 = vsub.s32 %v394, %v396
      %v398 = vrot.slane %v298, %v397
      %vm399 = vcmask 589312
      %v400 = vsel %vm399, %v398, %v393
      %v401 = vadd.s32 %v340, 4294967224
      %v402 = vlaneseq
      %v403 = vshrl.u32 %v402, 7
      %v404 = vsub.s32 %v401, %v403
      %v405 = vrot.slane %v299, %v404
      %vm406 = vcmask 654912
      %v407 = vsel %vm406, %v405, %v400
      %v408 = vadd.s32 %v340, 4294967216
      %v409 = vlaneseq
      %v410 = vshrl.u32 %v409, 7
      %v411 = vsub.s32 %v408, %v410
      %v412 = vrot.slane %v300, %v411
      %vm413 = vcmask 720512
      %v414 = vsel %vm413, %v412, %v407
      %v415 = vadd.s32 %v340, 4294967208
      %v416 = vlaneseq
      %v417 = vshrl.u32 %v416, 7
      %v418 = vsub.s32 %v415, %v417
      %v419 = vrot.slane %v301, %v418
      %vm420 = vcmask 786112
      %v421 = vsel %vm420, %v419, %v414
      %v422 = vadd.s32 %v340, 4294967200
      %v423 = vlaneseq
      %v424 = vshrl.u32 %v423, 7
      %v425 = vsub.s32 %v422, %v424
      %v426 = vrot.slane %v302, %v425
      %vm427 = vcmask 851712
      %v428 = vsel %vm427, %v426, %v421
      %v429 = vadd.s32 %v340, 4294967192
      %v430 = vlaneseq
      %v431 = vshrl.u32 %v430, 7
      %v432 = vsub.s32 %v429, %v431
      %v433 = vrot.slane %v303, %v432
      %vm434 = vcmask 917312
      %v435 = vsel %vm434, %v433, %v428
      %v436 = vadd.s32 %v340, 4294967184
      %v437 = vlaneseq
      %v438 = vshrl.u32 %v437, 7
      %v439 = vsub.s32 %v436, %v438
      %v440 = vrot.slane %v304, %v439
      %vm441 = vcmask 982912
      %v442 = vsel %vm441, %v440, %v435
      %v443 = vadd.s32 %v340, 4294967176
      %v444 = vlaneseq
      %v445 = vshrl.u32 %v444, 7
      %v446 = vsub.s32 %v443, %v445
      %v447 = vrot.slane %v305, %v446
      %vm448 = vcmask 1048512
      %v449 = vsel %vm448, %v447, %v442
      %451 = vmatprep.subr.mxu0 0.0
      %v452 = vand.u32 %v306, 4294901760
      %453 = vmatpush1.msra.mxu0 %v452
      %454 = vmatprep.subr.mxu0 0.0
      %v455 = vand.u32 %v307, 4294901760
      %456 = vmatpush1.msra.mxu0 %v455
      %457 = vmatprep.subr.mxu0 0.0
      %v458 = vand.u32 %v308, 4294901760
      %459 = vmatpush1.msra.mxu0 %v458
      %460 = vmatprep.subr.mxu0 0.0
      %v461 = vand.u32 %v309, 4294901760
      %462 = vmatpush1.msra.mxu0 %v461
      %463 = vmatprep.subr.mxu0 0.0
      %v464 = vand.u32 %v310, 4294901760
      %465 = vmatpush1.msra.mxu0 %v464
      %466 = vmatprep.subr.mxu0 0.0
      %v467 = vand.u32 %v311, 4294901760
      %468 = vmatpush1.msra.mxu0 %v467
      %469 = vmatprep.subr.mxu0 0.0
      %v470 = vand.u32 %v312, 4294901760
      %471 = vmatpush1.msra.mxu0 %v470
      %472 = vmatprep.subr.mxu0 0.0
      %v473 = vand.u32 %v313, 4294901760
      %474 = vmatpush1.msra.mxu0 %v473
      %475 = vmatprep.subr.mxu0 0.0
      %v476 = vand.u32 %v314, 4294901760
      %477 = vmatpush1.msra.mxu0 %v476
      %478 = vmatprep.subr.mxu0 0.0
      %v479 = vand.u32 %v315, 4294901760
      %480 = vmatpush1.msra.mxu0 %v479
      %481 = vmatprep.subr.mxu0 0.0
      %v482 = vand.u32 %v316, 4294901760
      %483 = vmatpush1.msra.mxu0 %v482
      %484 = vmatprep.subr.mxu0 0.0
      %v485 = vand.u32 %v317, 4294901760
      %486 = vmatpush1.msra.mxu0 %v485
      %487 = vmatprep.subr.mxu0 0.0
      %v488 = vand.u32 %v318, 4294901760
      %489 = vmatpush1.msra.mxu0 %v488
      %490 = vmatprep.subr.mxu0 0.0
      %v491 = vand.u32 %v319, 4294901760
      %492 = vmatpush1.msra.mxu0 %v491
      %493 = vmatprep.subr.mxu0 0.0
      %v494 = vand.u32 %v320, 4294901760
      %495 = vmatpush1.msra.mxu0 %v494
      %496 = vmatprep.subr.mxu0 0.0
      %v497 = vand.u32 %v321, 4294901760
      %498 = vmatpush1.msra.mxu0 %v497
      %499 = vmatprep.subr.mxu0 0.0
      %500 = vmatpush1.msra.mxu0 0.0
      %501 = vmatprep.subr.mxu0 0.0
      %502 = vmatpush1.msra.mxu0 0.0
      %503 = vmatprep.subr.mxu0 0.0
      %504 = vmatpush1.msra.mxu0 0.0
      %505 = vmatprep.subr.mxu0 0.0
      %506 = vmatpush1.msra.mxu0 0.0
      %507 = vmatprep.subr.mxu0 0.0
      %508 = vmatpush1.msra.mxu0 0.0
      %509 = vmatprep.subr.mxu0 0.0
      %510 = vmatpush1.msra.mxu0 0.0
      %511 = vmatprep.subr.mxu0 0.0
      %512 = vmatpush1.msra.mxu0 0.0
      %513 = vmatprep.subr.mxu0 0.0
      %514 = vmatpush1.msra.mxu0 0.0
      %515 = vmatprep.subr.mxu0 0.0
      %516 = vmatpush1.msra.mxu0 0.0
      %517 = vmatprep.subr.mxu0 0.0
      %518 = vmatpush1.msra.mxu0 0.0
      %519 = vmatprep.subr.mxu0 0.0
      %520 = vmatpush1.msra.mxu0 0.0
      %521 = vmatprep.subr.mxu0 0.0
      %522 = vmatpush1.msra.mxu0 0.0
      %523 = vmatprep.subr.mxu0 0.0
      %524 = vmatpush1.msra.mxu0 0.0
      %525 = vmatprep.subr.mxu0 0.0
      %526 = vmatpush1.msra.mxu0 0.0
      %527 = vmatprep.subr.mxu0 0.0
      %528 = vmatpush1.msra.mxu0 0.0
      %529 = vmatprep.subr.mxu0 0.0
      %530 = vmatpush1.msra.mxu0 0.0
      %531 = vmatprep.mubr.f32.mxu0 0.0
      %v532 = vand.u32 %v449, 4294901760
      %v533 = vsub.f32 %v449, %v532
      %v534 = vand.u32 %v533, 4294901760
      %v535 = vsub.f32 %v533, %v534
      %v536 = vand.u32 %v535, 4294901760
      %537 = vmatmul.mubr.f32.gmra.mrb[0].mxu0 %v536
      %v538 = vpop.f32.mrb[0].mxu0
      %v539 = vadd.f32 %v322, %v538
      %v540 = vpop.f32.mrb[0].mxu0
      %541 = vdwg.mxu0
      %542 = vmatprep.subr.mxu0 0.0
      %v543 = vand.u32 %v306, 4294901760
      %v544 = vsub.f32 %v306, %v543
      %v545 = vand.u32 %v544, 4294901760
      %v546 = vsub.f32 %v544, %v545
      %v547 = vand.u32 %v546, 4294901760
      %548 = vmatpush1.msra.mxu0 %v547
      %549 = vmatprep.subr.mxu0 0.0
      %v550 = vand.u32 %v307, 4294901760
      %v551 = vsub.f32 %v307, %v550
      %v552 = vand.u32 %v551, 4294901760
      %v553 = vsub.f32 %v551, %v552
      %v554 = vand.u32 %v553, 4294901760
      %555 = vmatpush1.msra.mxu0 %v554
      %556 = vmatprep.subr.mxu0 0.0
      %v557 = vand.u32 %v308, 4294901760
      %v558 = vsub.f32 %v308, %v557
      %v559 = vand.u32 %v558, 4294901760
      %v560 = vsub.f32 %v558, %v559
      %v561 = vand.u32 %v560, 4294901760
      %562 = vmatpush1.msra.mxu0 %v561
      %563 = vmatprep.subr.mxu0 0.0
      %v564 = vand.u32 %v309, 4294901760
      %v565 = vsub.f32 %v309, %v564
      %v566 = vand.u32 %v565, 4294901760
      %v567 = vsub.f32 %v565, %v566
      %v568 = vand.u32 %v567, 4294901760
      %569 = vmatpush1.msra.mxu0 %v568
      %570 = vmatprep.subr.mxu0 0.0
      %v571 = vand.u32 %v310, 4294901760
      %v572 = vsub.f32 %v310, %v571
      %v573 = vand.u32 %v572, 4294901760
      %v574 = vsub.f32 %v572, %v573
      %v575 = vand.u32 %v574, 4294901760
      %576 = vmatpush1.msra.mxu0 %v575
      %577 = vmatprep.subr.mxu0 0.0
      %v578 = vand.u32 %v311, 4294901760
      %v579 = vsub.f32 %v311, %v578
      %v580 = vand.u32 %v579, 4294901760
      %v581 = vsub.f32 %v579, %v580
      %v582 = vand.u32 %v581, 4294901760
      %583 = vmatpush1.msra.mxu0 %v582
      %584 = vmatprep.subr.mxu0 0.0
      %v585 = vand.u32 %v312, 4294901760
      %v586 = vsub.f32 %v312, %v585
      %v587 = vand.u32 %v586, 4294901760
      %v588 = vsub.f32 %v586, %v587
      %v589 = vand.u32 %v588, 4294901760
      %590 = vmatpush1.msra.mxu0 %v589
      %591 = vmatprep.subr.mxu0 0.0
      %v592 = vand.u32 %v313, 4294901760
      %v593 = vsub.f32 %v313, %v592
      %v594 = vand.u32 %v593, 4294901760
      %v595 = vsub.f32 %v593, %v594
      %v596 = vand.u32 %v595, 4294901760
      %597 = vmatpush1.msra.mxu0 %v596
      %598 = vmatprep.subr.mxu0 0.0
      %v599 = vand.u32 %v314, 4294901760
      %v600 = vsub.f32 %v314, %v599
      %v601 = vand.u32 %v600, 4294901760
      %v602 = vsub.f32 %v600, %v601
      %v603 = vand.u32 %v602, 4294901760
      %604 = vmatpush1.msra.mxu0 %v603
      %605 = vmatprep.subr.mxu0 0.0
      %v606 = vand.u32 %v315, 4294901760
      %v607 = vsub.f32 %v315, %v606
      %v608 = vand.u32 %v607, 4294901760
      %v609 = vsub.f32 %v607, %v608
      %v610 = vand.u32 %v609, 4294901760
      %611 = vmatpush1.msra.mxu0 %v610
      %612 = vmatprep.subr.mxu0 0.0
      %v613 = vand.u32 %v316, 4294901760
      %v614 = vsub.f32 %v316, %v613
      %v615 = vand.u32 %v614, 4294901760
      %v616 = vsub.f32 %v614, %v615
      %v617 = vand.u32 %v616, 4294901760
      %618 = vmatpush1.msra.mxu0 %v617
      %619 = vmatprep.subr.mxu0 0.0
      %v620 = vand.u32 %v317, 4294901760
      %v621 = vsub.f32 %v317, %v620
      %v622 = vand.u32 %v621, 4294901760
      %v623 = vsub.f32 %v621, %v622
      %v624 = vand.u32 %v623, 4294901760
      %625 = vmatpush1.msra.mxu0 %v624
      %626 = vmatprep.subr.mxu0 0.0
      %v627 = vand.u32 %v318, 4294901760
      %v628 = vsub.f32 %v318, %v627
      %v629 = vand.u32 %v628, 4294901760
      %v630 = vsub.f32 %v628, %v629
      %v631 = vand.u32 %v630, 4294901760
      %632 = vmatpush1.msra.mxu0 %v631
      %633 = vmatprep.subr.mxu0 0.0
      %v634 = vand.u32 %v319, 4294901760
      %v635 = vsub.f32 %v319, %v634
      %v636 = vand.u32 %v635, 4294901760
      %v637 = vsub.f32 %v635, %v636
      %v638 = vand.u32 %v637, 4294901760
      %639 = vmatpush1.msra.mxu0 %v638
      %640 = vmatprep.subr.mxu0 0.0
      %v641 = vand.u32 %v320, 4294901760
      %v642 = vsub.f32 %v320, %v641
      %v643 = vand.u32 %v642, 4294901760
      %v644 = vsub.f32 %v642, %v643
      %v645 = vand.u32 %v644, 4294901760
      %646 = vmatpush1.msra.mxu0 %v645
      %647 = vmatprep.subr.mxu0 0.0
      %v648 = vand.u32 %v321, 4294901760
      %v649 = vsub.f32 %v321, %v648
      %v650 = vand.u32 %v649, 4294901760
      %v651 = vsub.f32 %v649, %v650
      %v652 = vand.u32 %v651, 4294901760
      %653 = vmatpush1.msra.mxu0 %v652
      %654 = vmatprep.subr.mxu0 0.0
      %655 = vmatpush1.msra.mxu0 0.0
      %656 = vmatprep.subr.mxu0 0.0
      %657 = vmatpush1.msra.mxu0 0.0
      %658 = vmatprep.subr.mxu0 0.0
      %659 = vmatpush1.msra.mxu0 0.0
      %660 = vmatprep.subr.mxu0 0.0
      %661 = vmatpush1.msra.mxu0 0.0
      %662 = vmatprep.subr.mxu0 0.0
      %663 = vmatpush1.msra.mxu0 0.0
      %664 = vmatprep.subr.mxu0 0.0
      %665 = vmatpush1.msra.mxu0 0.0
      %666 = vmatprep.subr.mxu0 0.0
      %667 = vmatpush1.msra.mxu0 0.0
      %668 = vmatprep.subr.mxu0 0.0
      %669 = vmatpush1.msra.mxu0 0.0
      %670 = vmatprep.subr.mxu0 0.0
      %671 = vmatpush1.msra.mxu0 0.0
      %672 = vmatprep.subr.mxu0 0.0
      %673 = vmatpush1.msra.mxu0 0.0
      %674 = vmatprep.subr.mxu0 0.0
      %675 = vmatpush1.msra.mxu0 0.0
      %676 = vmatprep.subr.mxu0 0.0
      %677 = vmatpush1.msra.mxu0 0.0
      %678 = vmatprep.subr.mxu0 0.0
      %679 = vmatpush1.msra.mxu0 0.0
      %680 = vmatprep.subr.mxu0 0.0
      %681 = vmatpush1.msra.mxu0 0.0
      %682 = vmatprep.subr.mxu0 0.0
      %683 = vmatpush1.msra.mxu0 0.0
      %684 = vmatprep.subr.mxu0 0.0
      %685 = vmatpush1.msra.mxu0 0.0
      %686 = vmatprep.mubr.f32.mxu0 0.0
      %v687 = vand.u32 %v449, 4294901760
      %688 = vmatmul.mubr.f32.gmra.mrb[0].mxu0 %v687
      %v689 = vpop.f32.mrb[0].mxu0
      %v690 = vadd.f32 %v539, %v689
      %v691 = vpop.f32.mrb[0].mxu0
      %692 = vdwg.mxu0
      %693 = vmatprep.subr.mxu0 0.0
      %v694 = vand.u32 %v306, 4294901760
      %v695 = vsub.f32 %v306, %v694
      %696 = vmatpush1.msra.mxu0 %v695
      %697 = vmatprep.subr.mxu0 0.0
      %v698 = vand.u32 %v307, 4294901760
      %v699 = vsub.f32 %v307, %v698
      %700 = vmatpush1.msra.mxu0 %v699
      %701 = vmatprep.subr.mxu0 0.0
      %v702 = vand.u32 %v308, 4294901760
      %v703 = vsub.f32 %v308, %v702
      %704 = vmatpush1.msra.mxu0 %v703
      %705 = vmatprep.subr.mxu0 0.0
      %v706 = vand.u32 %v309, 4294901760
      %v707 = vsub.f32 %v309, %v706
      %708 = vmatpush1.msra.mxu0 %v707
      %709 = vmatprep.subr.mxu0 0.0
      %v710 = vand.u32 %v310, 4294901760
      %v711 = vsub.f32 %v310, %v710
      %712 = vmatpush1.msra.mxu0 %v711
      %713 = vmatprep.subr.mxu0 0.0
      %v714 = vand.u32 %v311, 4294901760
      %v715 = vsub.f32 %v311, %v714
      %716 = vmatpush1.msra.mxu0 %v715
      %717 = vmatprep.subr.mxu0 0.0
      %v718 = vand.u32 %v312, 4294901760
      %v719 = vsub.f32 %v312, %v718
      %720 = vmatpush1.msra.mxu0 %v719
      %721 = vmatprep.subr.mxu0 0.0
      %v722 = vand.u32 %v313, 4294901760
      %v723 = vsub.f32 %v313, %v722
      %724 = vmatpush1.msra.mxu0 %v723
      %725 = vmatprep.subr.mxu0 0.0
      %v726 = vand.u32 %v314, 4294901760
      %v727 = vsub.f32 %v314, %v726
      %728 = vmatpush1.msra.mxu0 %v727
      %729 = vmatprep.subr.mxu0 0.0
      %v730 = vand.u32 %v315, 4294901760
      %v731 = vsub.f32 %v315, %v730
      %732 = vmatpush1.msra.mxu0 %v731
      %733 = vmatprep.subr.mxu0 0.0
      %v734 = vand.u32 %v316, 4294901760
      %v735 = vsub.f32 %v316, %v734
      %736 = vmatpush1.msra.mxu0 %v735
      %737 = vmatprep.subr.mxu0 0.0
      %v738 = vand.u32 %v317, 4294901760
      %v739 = vsub.f32 %v317, %v738
      %740 = vmatpush1.msra.mxu0 %v739
      %741 = vmatprep.subr.mxu0 0.0
      %v742 = vand.u32 %v318, 4294901760
      %v743 = vsub.f32 %v318, %v742
      %744 = vmatpush1.msra.mxu0 %v743
      %745 = vmatprep.subr.mxu0 0.0
      %v746 = vand.u32 %v319, 4294901760
      %v747 = vsub.f32 %v319, %v746
      %748 = vmatpush1.msra.mxu0 %v747
      %749 = vmatprep.subr.mxu0 0.0
      %v750 = vand.u32 %v320, 4294901760
      %v751 = vsub.f32 %v320, %v750
      %752 = vmatpush1.msra.mxu0 %v751
      %753 = vmatprep.subr.mxu0 0.0
      %v754 = vand.u32 %v321, 4294901760
      %v755 = vsub.f32 %v321, %v754
      %756 = vmatpush1.msra.mxu0 %v755
      %757 = vmatprep.subr.mxu0 0.0
      %758 = vmatpush1.msra.mxu0 0.0
      %759 = vmatprep.subr.mxu0 0.0
      %760 = vmatpush1.msra.mxu0 0.0
      %761 = vmatprep.subr.mxu0 0.0
      %762 = vmatpush1.msra.mxu0 0.0
      %763 = vmatprep.subr.mxu0 0.0
      %764 = vmatpush1.msra.mxu0 0.0
      %765 = vmatprep.subr.mxu0 0.0
      %766 = vmatpush1.msra.mxu0 0.0
      %767 = vmatprep.subr.mxu0 0.0
      %768 = vmatpush1.msra.mxu0 0.0
      %769 = vmatprep.subr.mxu0 0.0
      %770 = vmatpush1.msra.mxu0 0.0
      %771 = vmatprep.subr.mxu0 0.0
      %772 = vmatpush1.msra.mxu0 0.0
      %773 = vmatprep.subr.mxu0 0.0
      %774 = vmatpush1.msra.mxu0 0.0
      %775 = vmatprep.subr.mxu0 0.0
      %776 = vmatpush1.msra.mxu0 0.0
      %777 = vmatprep.subr.mxu0 0.0
      %778 = vmatpush1.msra.mxu0 0.0
      %779 = vmatprep.subr.mxu0 0.0
      %780 = vmatpush1.msra.mxu0 0.0
      %781 = vmatprep.subr.mxu0 0.0
      %782 = vmatpush1.msra.mxu0 0.0
      %783 = vmatprep.subr.mxu0 0.0
      %784 = vmatpush1.msra.mxu0 0.0
      %785 = vmatprep.subr.mxu0 0.0
      %786 = vmatpush1.msra.mxu0 0.0
      %787 = vmatprep.subr.mxu0 0.0
      %788 = vmatpush1.msra.mxu0 0.0
      %789 = vmatprep.mubr.f32.mxu0 0.0
      %v790 = vand.u32 %v449, 4294901760
      %v791 = vsub.f32 %v449, %v790
      %792 = vmatmul.mubr.f32.gmra.mrb[0].mxu0 %v791
      %v793 = vpop.f32.mrb[0].mxu0
      %v794 = vadd.f32 %v690, %v793
      %v795 = vpop.f32.mrb[0].mxu0
      %796 = vdwg.mxu0
      %797 = vmatprep.subr.mxu0 0.0
      %v798 = vand.u32 %v306, 4294901760
      %799 = vmatpush1.msra.mxu0 %v798
      %800 = vmatprep.subr.mxu0 0.0
      %v801 = vand.u32 %v307, 4294901760
      %802 = vmatpush1.msra.mxu0 %v801
      %803 = vmatprep.subr.mxu0 0.0
      %v804 = vand.u32 %v308, 4294901760
      %805 = vmatpush1.msra.mxu0 %v804
      %806 = vmatprep.subr.mxu0 0.0
      %v807 = vand.u32 %v309, 4294901760
      %808 = vmatpush1.msra.mxu0 %v807
      %809 = vmatprep.subr.mxu0 0.0
      %v810 = vand.u32 %v310, 4294901760
      %811 = vmatpush1.msra.mxu0 %v810
      %812 = vmatprep.subr.mxu0 0.0
      %v813 = vand.u32 %v311, 4294901760
      %814 = vmatpush1.msra.mxu0 %v813
      %815 = vmatprep.subr.mxu0 0.0
      %v816 = vand.u32 %v312, 4294901760
      %817 = vmatpush1.msra.mxu0 %v816
      %818 = vmatprep.subr.mxu0 0.0
      %v819 = vand.u32 %v313, 4294901760
      %820 = vmatpush1.msra.mxu0 %v819
      %821 = vmatprep.subr.mxu0 0.0
      %v822 = vand.u32 %v314, 4294901760
      %823 = vmatpush1.msra.mxu0 %v822
      %824 = vmatprep.subr.mxu0 0.0
      %v825 = vand.u32 %v315, 4294901760
      %826 = vmatpush1.msra.mxu0 %v825
      %827 = vmatprep.subr.mxu0 0.0
      %v828 = vand.u32 %v316, 4294901760
      %829 = vmatpush1.msra.mxu0 %v828
      %830 = vmatprep.subr.mxu0 0.0
      %v831 = vand.u32 %v317, 4294901760
      %832 = vmatpush1.msra.mxu0 %v831
      %833 = vmatprep.subr.mxu0 0.0
      %v834 = vand.u32 %v318, 4294901760
      %835 = vmatpush1.msra.mxu0 %v834
      %836 = vmatprep.subr.mxu0 0.0
      %v837 = vand.u32 %v319, 4294901760
      %838 = vmatpush1.msra.mxu0 %v837
      %839 = vmatprep.subr.mxu0 0.0
      %v840 = vand.u32 %v320, 4294901760
      %841 = vmatpush1.msra.mxu0 %v840
      %842 = vmatprep.subr.mxu0 0.0
      %v843 = vand.u32 %v321, 4294901760
      %844 = vmatpush1.msra.mxu0 %v843
      %845 = vmatprep.subr.mxu0 0.0
      %846 = vmatpush1.msra.mxu0 0.0
      %847 = vmatprep.subr.mxu0 0.0
      %848 = vmatpush1.msra.mxu0 0.0
      %849 = vmatprep.subr.mxu0 0.0
      %850 = vmatpush1.msra.mxu0 0.0
      %851 = vmatprep.subr.mxu0 0.0
      %852 = vmatpush1.msra.mxu0 0.0
      %853 = vmatprep.subr.mxu0 0.0
      %854 = vmatpush1.msra.mxu0 0.0
      %855 = vmatprep.subr.mxu0 0.0
      %856 = vmatpush1.msra.mxu0 0.0
      %857 = vmatprep.subr.mxu0 0.0
      %858 = vmatpush1.msra.mxu0 0.0
      %859 = vmatprep.subr.mxu0 0.0
      %860 = vmatpush1.msra.mxu0 0.0
      %861 = vmatprep.subr.mxu0 0.0
      %862 = vmatpush1.msra.mxu0 0.0
      %863 = vmatprep.subr.mxu0 0.0
      %864 = vmatpush1.msra.mxu0 0.0
      %865 = vmatprep.subr.mxu0 0.0
      %866 = vmatpush1.msra.mxu0 0.0
      %867 = vmatprep.subr.mxu0 0.0
      %868 = vmatpush1.msra.mxu0 0.0
      %869 = vmatprep.subr.mxu0 0.0
      %870 = vmatpush1.msra.mxu0 0.0
      %871 = vmatprep.subr.mxu0 0.0
      %872 = vmatpush1.msra.mxu0 0.0
      %873 = vmatprep.subr.mxu0 0.0
      %874 = vmatpush1.msra.mxu0 0.0
      %875 = vmatprep.subr.mxu0 0.0
      %876 = vmatpush1.msra.mxu0 0.0
      %877 = vmatprep.mubr.f32.mxu0 0.0
      %v878 = vand.u32 %v449, 4294901760
      %v879 = vsub.f32 %v449, %v878
      %v880 = vand.u32 %v879, 4294901760
      %881 = vmatmul.mubr.f32.gmra.mrb[0].mxu0 %v880
      %v882 = vpop.f32.mrb[0].mxu0
      %v883 = vadd.f32 %v794, %v882
      %v884 = vpop.f32.mrb[0].mxu0
      %885 = vdwg.mxu0
      %886 = vmatprep.subr.mxu0 0.0
      %v887 = vand.u32 %v306, 4294901760
      %v888 = vsub.f32 %v306, %v887
      %v889 = vand.u32 %v888, 4294901760
      %890 = vmatpush1.msra.mxu0 %v889
      %891 = vmatprep.subr.mxu0 0.0
      %v892 = vand.u32 %v307, 4294901760
      %v893 = vsub.f32 %v307, %v892
      %v894 = vand.u32 %v893, 4294901760
      %895 = vmatpush1.msra.mxu0 %v894
      %896 = vmatprep.subr.mxu0 0.0
      %v897 = vand.u32 %v308, 4294901760
      %v898 = vsub.f32 %v308, %v897
      %v899 = vand.u32 %v898, 4294901760
      %900 = vmatpush1.msra.mxu0 %v899
      %901 = vmatprep.subr.mxu0 0.0
      %v902 = vand.u32 %v309, 4294901760
      %v903 = vsub.f32 %v309, %v902
      %v904 = vand.u32 %v903, 4294901760
      %905 = vmatpush1.msra.mxu0 %v904
      %906 = vmatprep.subr.mxu0 0.0
      %v907 = vand.u32 %v310, 4294901760
      %v908 = vsub.f32 %v310, %v907
      %v909 = vand.u32 %v908, 4294901760
      %910 = vmatpush1.msra.mxu0 %v909
      %911 = vmatprep.subr.mxu0 0.0
      %v912 = vand.u32 %v311, 4294901760
      %v913 = vsub.f32 %v311, %v912
      %v914 = vand.u32 %v913, 4294901760
      %915 = vmatpush1.msra.mxu0 %v914
      %916 = vmatprep.subr.mxu0 0.0
      %v917 = vand.u32 %v312, 4294901760
      %v918 = vsub.f32 %v312, %v917
      %v919 = vand.u32 %v918, 4294901760
      %920 = vmatpush1.msra.mxu0 %v919
      %921 = vmatprep.subr.mxu0 0.0
      %v922 = vand.u32 %v313, 4294901760
      %v923 = vsub.f32 %v313, %v922
      %v924 = vand.u32 %v923, 4294901760
      %925 = vmatpush1.msra.mxu0 %v924
      %926 = vmatprep.subr.mxu0 0.0
      %v927 = vand.u32 %v314, 4294901760
      %v928 = vsub.f32 %v314, %v927
      %v929 = vand.u32 %v928, 4294901760
      %930 = vmatpush1.msra.mxu0 %v929
      %931 = vmatprep.subr.mxu0 0.0
      %v932 = vand.u32 %v315, 4294901760
      %v933 = vsub.f32 %v315, %v932
      %v934 = vand.u32 %v933, 4294901760
      %935 = vmatpush1.msra.mxu0 %v934
      %936 = vmatprep.subr.mxu0 0.0
      %v937 = vand.u32 %v316, 4294901760
      %v938 = vsub.f32 %v316, %v937
      %v939 = vand.u32 %v938, 4294901760
      %940 = vmatpush1.msra.mxu0 %v939
      %941 = vmatprep.subr.mxu0 0.0
      %v942 = vand.u32 %v317, 4294901760
      %v943 = vsub.f32 %v317, %v942
      %v944 = vand.u32 %v943, 4294901760
      %945 = vmatpush1.msra.mxu0 %v944
      %946 = vmatprep.subr.mxu0 0.0
      %v947 = vand.u32 %v318, 4294901760
      %v948 = vsub.f32 %v318, %v947
      %v949 = vand.u32 %v948, 4294901760
      %950 = vmatpush1.msra.mxu0 %v949
      %951 = vmatprep.subr.mxu0 0.0
      %v952 = vand.u32 %v319, 4294901760
      %v953 = vsub.f32 %v319, %v952
      %v954 = vand.u32 %v953, 4294901760
      %955 = vmatpush1.msra.mxu0 %v954
      %956 = vmatprep.subr.mxu0 0.0
      %v957 = vand.u32 %v320, 4294901760
      %v958 = vsub.f32 %v320, %v957
      %v959 = vand.u32 %v958, 4294901760
      %960 = vmatpush1.msra.mxu0 %v959
      %961 = vmatprep.subr.mxu0 0.0
      %v962 = vand.u32 %v321, 4294901760
      %v963 = vsub.f32 %v321, %v962
      %v964 = vand.u32 %v963, 4294901760
      %965 = vmatpush1.msra.mxu0 %v964
      %966 = vmatprep.subr.mxu0 0.0
      %967 = vmatpush1.msra.mxu0 0.0
      %968 = vmatprep.subr.mxu0 0.0
      %969 = vmatpush1.msra.mxu0 0.0
      %970 = vmatprep.subr.mxu0 0.0
      %971 = vmatpush1.msra.mxu0 0.0
      %972 = vmatprep.subr.mxu0 0.0
      %973 = vmatpush1.msra.mxu0 0.0
      %974 = vmatprep.subr.mxu0 0.0
      %975 = vmatpush1.msra.mxu0 0.0
      %976 = vmatprep.subr.mxu0 0.0
      %977 = vmatpush1.msra.mxu0 0.0
      %978 = vmatprep.subr.mxu0 0.0
      %979 = vmatpush1.msra.mxu0 0.0
      %980 = vmatprep.subr.mxu0 0.0
      %981 = vmatpush1.msra.mxu0 0.0
      %982 = vmatprep.subr.mxu0 0.0
      %983 = vmatpush1.msra.mxu0 0.0
      %984 = vmatprep.subr.mxu0 0.0
      %985 = vmatpush1.msra.mxu0 0.0
      %986 = vmatprep.subr.mxu0 0.0
      %987 = vmatpush1.msra.mxu0 0.0
      %988 = vmatprep.subr.mxu0 0.0
      %989 = vmatpush1.msra.mxu0 0.0
      %990 = vmatprep.subr.mxu0 0.0
      %991 = vmatpush1.msra.mxu0 0.0
      %992 = vmatprep.subr.mxu0 0.0
      %993 = vmatpush1.msra.mxu0 0.0
      %994 = vmatprep.subr.mxu0 0.0
      %995 = vmatpush1.msra.mxu0 0.0
      %996 = vmatprep.subr.mxu0 0.0
      %997 = vmatpush1.msra.mxu0 0.0
      %998 = vmatprep.mubr.f32.mxu0 0.0
      %v999 = vand.u32 %v449, 4294901760
      %1000 = vmatmul.mubr.f32.gmra.mrb[0].mxu0 %v999
      %v1001 = vpop.f32.mrb[0].mxu0
      %v1002 = vadd.f32 %v883, %v1001
      %v1003 = vpop.f32.mrb[0].mxu0
      %1004 = vdwg.mxu0
      %1005 = vmatprep.subr.mxu0 0.0
      %v1006 = vand.u32 %v306, 4294901760
      %1007 = vmatpush1.msra.mxu0 %v1006
      %1008 = vmatprep.subr.mxu0 0.0
      %v1009 = vand.u32 %v307, 4294901760
      %1010 = vmatpush1.msra.mxu0 %v1009
      %1011 = vmatprep.subr.mxu0 0.0
      %v1012 = vand.u32 %v308, 4294901760
      %1013 = vmatpush1.msra.mxu0 %v1012
      %1014 = vmatprep.subr.mxu0 0.0
      %v1015 = vand.u32 %v309, 4294901760
      %1016 = vmatpush1.msra.mxu0 %v1015
      %1017 = vmatprep.subr.mxu0 0.0
      %v1018 = vand.u32 %v310, 4294901760
      %1019 = vmatpush1.msra.mxu0 %v1018
      %1020 = vmatprep.subr.mxu0 0.0
      %v1021 = vand.u32 %v311, 4294901760
      %1022 = vmatpush1.msra.mxu0 %v1021
      %1023 = vmatprep.subr.mxu0 0.0
      %v1024 = vand.u32 %v312, 4294901760
      %1025 = vmatpush1.msra.mxu0 %v1024
      %1026 = vmatprep.subr.mxu0 0.0
      %v1027 = vand.u32 %v313, 4294901760
      %1028 = vmatpush1.msra.mxu0 %v1027
      %1029 = vmatprep.subr.mxu0 0.0
      %v1030 = vand.u32 %v314, 4294901760
      %1031 = vmatpush1.msra.mxu0 %v1030
      %1032 = vmatprep.subr.mxu0 0.0
      %v1033 = vand.u32 %v315, 4294901760
      %1034 = vmatpush1.msra.mxu0 %v1033
      %1035 = vmatprep.subr.mxu0 0.0
      %v1036 = vand.u32 %v316, 4294901760
      %1037 = vmatpush1.msra.mxu0 %v1036
      %1038 = vmatprep.subr.mxu0 0.0
      %v1039 = vand.u32 %v317, 4294901760
      %1040 = vmatpush1.msra.mxu0 %v1039
      %1041 = vmatprep.subr.mxu0 0.0
      %v1042 = vand.u32 %v318, 4294901760
      %1043 = vmatpush1.msra.mxu0 %v1042
      %1044 = vmatprep.subr.mxu0 0.0
      %v1045 = vand.u32 %v319, 4294901760
      %1046 = vmatpush1.msra.mxu0 %v1045
      %1047 = vmatprep.subr.mxu0 0.0
      %v1048 = vand.u32 %v320, 4294901760
      %1049 = vmatpush1.msra.mxu0 %v1048
      %1050 = vmatprep.subr.mxu0 0.0
      %v1051 = vand.u32 %v321, 4294901760
      %1052 = vmatpush1.msra.mxu0 %v1051
      %1053 = vmatprep.subr.mxu0 0.0
      %1054 = vmatpush1.msra.mxu0 0.0
      %1055 = vmatprep.subr.mxu0 0.0
      %1056 = vmatpush1.msra.mxu0 0.0
      %1057 = vmatprep.subr.mxu0 0.0
      %1058 = vmatpush1.msra.mxu0 0.0
      %1059 = vmatprep.subr.mxu0 0.0
      %1060 = vmatpush1.msra.mxu0 0.0
      %1061 = vmatprep.subr.mxu0 0.0
      %1062 = vmatpush1.msra.mxu0 0.0
      %1063 = vmatprep.subr.mxu0 0.0
      %1064 = vmatpush1.msra.mxu0 0.0
      %1065 = vmatprep.subr.mxu0 0.0
      %1066 = vmatpush1.msra.mxu0 0.0
      %1067 = vmatprep.subr.mxu0 0.0
      %1068 = vmatpush1.msra.mxu0 0.0
      %1069 = vmatprep.subr.mxu0 0.0
      %1070 = vmatpush1.msra.mxu0 0.0
      %1071 = vmatprep.subr.mxu0 0.0
      %1072 = vmatpush1.msra.mxu0 0.0
      %1073 = vmatprep.subr.mxu0 0.0
      %1074 = vmatpush1.msra.mxu0 0.0
      %1075 = vmatprep.subr.mxu0 0.0
      %1076 = vmatpush1.msra.mxu0 0.0
      %1077 = vmatprep.subr.mxu0 0.0
      %1078 = vmatpush1.msra.mxu0 0.0
      %1079 = vmatprep.subr.mxu0 0.0
      %1080 = vmatpush1.msra.mxu0 0.0
      %1081 = vmatprep.subr.mxu0 0.0
      %1082 = vmatpush1.msra.mxu0 0.0
      %1083 = vmatprep.subr.mxu0 0.0
      %1084 = vmatpush1.msra.mxu0 0.0
      %1085 = vmatprep.mubr.f32.mxu0 0.0
      %v1086 = vand.u32 %v449, 4294901760
      %1087 = vmatmul.mubr.f32.gmra.mrb[0].mxu0 %v1086
      %v1088 = vpop.f32.mrb[0].mxu0
      %v1089 = vadd.f32 %v1002, %v1088
      %v1090 = vpop.f32.mrb[0].mxu0
      %1091 = vdwg.mxu0
      %v1092 = vmax.f32 %v1089, 0.0
      %v1093 = vld [vmem:[%s3] sm:$0xff]
      %v1094 = vld [vmem:[%s4] sm:$0x1]
      %vm1095 = vcmask 64512
      %v1097 = vsel %vm1095, %v1092, 0
      %1099 = vmatprep.subr.mxu0 0.0
      %v1100 = vand.u32 %v1093, 4294901760
      %1101 = vmatpush1.msra.mxu0 %v1100
      %1102 = vmatprep.subr.mxu0 0.0
      %1103 = vmatpush1.msra.mxu0 0.0
      %1104 = vmatprep.subr.mxu0 0.0
      %1105 = vmatpush1.msra.mxu0 0.0
      %1106 = vmatprep.subr.mxu0 0.0
      %1107 = vmatpush1.msra.mxu0 0.0
      %1108 = vmatprep.subr.mxu0 0.0
      %1109 = vmatpush1.msra.mxu0 0.0
      %1110 = vmatprep.subr.mxu0 0.0
      %1111 = vmatpush1.msra.mxu0 0.0
      %1112 = vmatprep.subr.mxu0 0.0
      %1113 = vmatpush1.msra.mxu0 0.0
      %1114 = vmatprep.subr.mxu0 0.0
      %1115 = vmatpush1.msra.mxu0 0.0
      %1116 = vmatprep.subr.mxu0 0.0
      %1117 = vmatpush1.msra.mxu0 0.0
      %1118 = vmatprep.subr.mxu0 0.0
      %1119 = vmatpush1.msra.mxu0 0.0
      %1120 = vmatprep.subr.mxu0 0.0
      %1121 = vmatpush1.msra.mxu0 0.0
      %1122 = vmatprep.subr.mxu0 0.0
      %1123 = vmatpush1.msra.mxu0 0.0
      %1124 = vmatprep.subr.mxu0 0.0
      %1125 = vmatpush1.msra.mxu0 0.0
      %1126 = vmatprep.subr.mxu0 0.0
      %1127 = vmatpush1.msra.mxu0 0.0
      %1128 = vmatprep.subr.mxu0 0.0
      %1129 = vmatpush1.msra.mxu0 0.0
      %1130 = vmatprep.subr.mxu0 0.0
      %1131 = vmatpush1.msra.mxu0 0.0
      %1132 = vmatprep.subr.mxu0 0.0
      %1133 = vmatpush1.msra.mxu0 0.0
      %1134 = vmatprep.subr.mxu0 0.0
      %1135 = vmatpush1.msra.mxu0 0.0
      %1136 = vmatprep.subr.mxu0 0.0
      %1137 = vmatpush1.msra.mxu0 0.0
      %1138 = vmatprep.subr.mxu0 0.0
      %1139 = vmatpush1.msra.mxu0 0.0
      %1140 = vmatprep.subr.mxu0 0.0
      %1141 = vmatpush1.msra.mxu0 0.0
      %1142 = vmatprep.subr.mxu0 0.0
      %1143 = vmatpush1.msra.mxu0 0.0
      %1144 = vmatprep.subr.mxu0 0.0
      %1145 = vmatpush1.msra.mxu0 0.0
      %1146 = vmatprep.subr.mxu0 0.0
      %1147 = vmatpush1.msra.mxu0 0.0
      %1148 = vmatprep.subr.mxu0 0.0
      %1149 = vmatpush1.msra.mxu0 0.0
      %1150 = vmatprep.subr.mxu0 0.0
      %1151 = vmatpush1.msra.mxu0 0.0
      %1152 = vmatprep.subr.mxu0 0.0
      %1153 = vmatpush1.msra.mxu0 0.0
      %1154 = vmatprep.subr.mxu0 0.0
      %1155 = vmatpush1.msra.mxu0 0.0
      %1156 = vmatprep.subr.mxu0 0.0
      %1157 = vmatpush1.msra.mxu0 0.0
      %1158 = vmatprep.subr.mxu0 0.0
      %1159 = vmatpush1.msra.mxu0 0.0
      %1160 = vmatprep.subr.mxu0 0.0
      %1161 = vmatpush1.msra.mxu0 0.0
      %1162 = vmatprep.subr.mxu0 0.0
      %1163 = vmatpush1.msra.mxu0 0.0
      %1164 = vmatprep.mubr.f32.mxu0 0.0
      %v1165 = vand.u32 %v1097, 4294901760
      %v1166 = vsub.f32 %v1097, %v1165
      %v1167 = vand.u32 %v1166, 4294901760
      %v1168 = vsub.f32 %v1166, %v1167
      %v1169 = vand.u32 %v1168, 4294901760
      %1170 = vmatmul.mubr.f32.gmra.mrb[0].mxu0 %v1169
      %v1171 = vpop.f32.mrb[0].mxu0
      %v1172 = vadd.f32 %v1094, %v1171
      %v1173 = vpop.f32.mrb[0].mxu0
      %1174 = vdwg.mxu0
      %1175 = vmatprep.subr.mxu0 0.0
      %v1176 = vand.u32 %v1093, 4294901760
      %v1177 = vsub.f32 %v1093, %v1176
      %v1178 = vand.u32 %v1177, 4294901760
      %v1179 = vsub.f32 %v1177, %v1178
      %v1180 = vand.u32 %v1179, 4294901760
      %1181 = vmatpush1.msra.mxu0 %v1180
      %1182 = vmatprep.subr.mxu0 0.0
      %1183 = vmatpush1.msra.mxu0 0.0
      %1184 = vmatprep.subr.mxu0 0.0
      %1185 = vmatpush1.msra.mxu0 0.0
      %1186 = vmatprep.subr.mxu0 0.0
      %1187 = vmatpush1.msra.mxu0 0.0
      %1188 = vmatprep.subr.mxu0 0.0
      %1189 = vmatpush1.msra.mxu0 0.0
      %1190 = vmatprep.subr.mxu0 0.0
      %1191 = vmatpush1.msra.mxu0 0.0
      %1192 = vmatprep.subr.mxu0 0.0
      %1193 = vmatpush1.msra.mxu0 0.0
      %1194 = vmatprep.subr.mxu0 0.0
      %1195 = vmatpush1.msra.mxu0 0.0
      %1196 = vmatprep.subr.mxu0 0.0
      %1197 = vmatpush1.msra.mxu0 0.0
      %1198 = vmatprep.subr.mxu0 0.0
      %1199 = vmatpush1.msra.mxu0 0.0
      %1200 = vmatprep.subr.mxu0 0.0
      %1201 = vmatpush1.msra.mxu0 0.0
      %1202 = vmatprep.subr.mxu0 0.0
      %1203 = vmatpush1.msra.mxu0 0.0
      %1204 = vmatprep.subr.mxu0 0.0
      %1205 = vmatpush1.msra.mxu0 0.0
      %1206 = vmatprep.subr.mxu0 0.0
      %1207 = vmatpush1.msra.mxu0 0.0
      %1208 = vmatprep.subr.mxu0 0.0
      %1209 = vmatpush1.msra.mxu0 0.0
      %1210 = vmatprep.subr.mxu0 0.0
      %1211 = vmatpush1.msra.mxu0 0.0
      %1212 = vmatprep.subr.mxu0 0.0
      %1213 = vmatpush1.msra.mxu0 0.0
      %1214 = vmatprep.subr.mxu0 0.0
      %1215 = vmatpush1.msra.mxu0 0.0
      %1216 = vmatprep.subr.mxu0 0.0
      %1217 = vmatpush1.msra.mxu0 0.0
      %1218 = vmatprep.subr.mxu0 0.0
      %1219 = vmatpush1.msra.mxu0 0.0
      %1220 = vmatprep.subr.mxu0 0.0
      %1221 = vmatpush1.msra.mxu0 0.0
      %1222 = vmatprep.subr.mxu0 0.0
      %1223 = vmatpush1.msra.mxu0 0.0
      %1224 = vmatprep.subr.mxu0 0.0
      %1225 = vmatpush1.msra.mxu0 0.0
      %1226 = vmatprep.subr.mxu0 0.0
      %1227 = vmatpush1.msra.mxu0 0.0
      %1228 = vmatprep.subr.mxu0 0.0
      %1229 = vmatpush1.msra.mxu0 0.0
      %1230 = vmatprep.subr.mxu0 0.0
      %1231 = vmatpush1.msra.mxu0 0.0
      %1232 = vmatprep.subr.mxu0 0.0
      %1233 = vmatpush1.msra.mxu0 0.0
      %1234 = vmatprep.subr.mxu0 0.0
      %1235 = vmatpush1.msra.mxu0 0.0
      %1236 = vmatprep.subr.mxu0 0.0
      %1237 = vmatpush1.msra.mxu0 0.0
      %1238 = vmatprep.subr.mxu0 0.0
      %1239 = vmatpush1.msra.mxu0 0.0
      %1240 = vmatprep.subr.mxu0 0.0
      %1241 = vmatpush1.msra.mxu0 0.0
      %1242 = vmatprep.subr.mxu0 0.0
      %1243 = vmatpush1.msra.mxu0 0.0
      %1244 = vmatprep.mubr.f32.mxu0 0.0
      %v1245 = vand.u32 %v1097, 4294901760
      %1246 = vmatmul.mubr.f32.gmra.mrb[0].mxu0 %v1245
      %v1247 = vpop.f32.mrb[0].mxu0
      %v1248 = vadd.f32 %v1172, %v1247
      %v1249 = vpop.f32.mrb[0].mxu0
      %1250 = vdwg.mxu0
      %1251 = vmatprep.subr.mxu0 0.0
      %v1252 = vand.u32 %v1093, 4294901760
      %v1253 = vsub.f32 %v1093, %v1252
      %1254 = vmatpush1.msra.mxu0 %v1253
      %1255 = vmatprep.subr.mxu0 0.0
      %1256 = vmatpush1.msra.mxu0 0.0
      %1257 = vmatprep.subr.mxu0 0.0
      %1258 = vmatpush1.msra.mxu0 0.0
      %1259 = vmatprep.subr.mxu0 0.0
      %1260 = vmatpush1.msra.mxu0 0.0
      %1261 = vmatprep.subr.mxu0 0.0
      %1262 = vmatpush1.msra.mxu0 0.0
      %1263 = vmatprep.subr.mxu0 0.0
      %1264 = vmatpush1.msra.mxu0 0.0
      %1265 = vmatprep.subr.mxu0 0.0
      %1266 = vmatpush1.msra.mxu0 0.0
      %1267 = vmatprep.subr.mxu0 0.0
      %1268 = vmatpush1.msra.mxu0 0.0
      %1269 = vmatprep.subr.mxu0 0.0
      %1270 = vmatpush1.msra.mxu0 0.0
      %1271 = vmatprep.subr.mxu0 0.0
      %1272 = vmatpush1.msra.mxu0 0.0
      %1273 = vmatprep.subr.mxu0 0.0
      %1274 = vmatpush1.msra.mxu0 0.0
      %1275 = vmatprep.subr.mxu0 0.0
      %1276 = vmatpush1.msra.mxu0 0.0
      %1277 = vmatprep.subr.mxu0 0.0
      %1278 = vmatpush1.msra.mxu0 0.0
      %1279 = vmatprep.subr.mxu0 0.0
      %1280 = vmatpush1.msra.mxu0 0.0
      %1281 = vmatprep.subr.mxu0 0.0
      %1282 = vmatpush1.msra.mxu0 0.0
      %1283 = vmatprep.subr.mxu0 0.0
      %1284 = vmatpush1.msra.mxu0 0.0
      %1285 = vmatprep.subr.mxu0 0.0
      %1286 = vmatpush1.msra.mxu0 0.0
      %1287 = vmatprep.subr.mxu0 0.0
      %1288 = vmatpush1.msra.mxu0 0.0
      %1289 = vmatprep.subr.mxu0 0.0
      %1290 = vmatpush1.msra.mxu0 0.0
      %1291 = vmatprep.subr.mxu0 0.0
      %1292 = vmatpush1.msra.mxu0 0.0
      %1293 = vmatprep.subr.mxu0 0.0
      %1294 = vmatpush1.msra.mxu0 0.0
      %1295 = vmatprep.subr.mxu0 0.0
      %1296 = vmatpush1.msra.mxu0 0.0
      %1297 = vmatprep.subr.mxu0 0.0
      %1298 = vmatpush1.msra.mxu0 0.0
      %1299 = vmatprep.subr.mxu0 0.0
      %1300 = vmatpush1.msra.mxu0 0.0
      %1301 = vmatprep.subr.mxu0 0.0
      %1302 = vmatpush1.msra.mxu0 0.0
      %1303 = vmatprep.subr.mxu0 0.0
      %1304 = vmatpush1.msra.mxu0 0.0
      %1305 = vmatprep.subr.mxu0 0.0
      %1306 = vmatpush1.msra.mxu0 0.0
      %1307 = vmatprep.subr.mxu0 0.0
      %1308 = vmatpush1.msra.mxu0 0.0
      %1309 = vmatprep.subr.mxu0 0.0
      %1310 = vmatpush1.msra.mxu0 0.0
      %1311 = vmatprep.subr.mxu0 0.0
      %1312 = vmatpush1.msra.mxu0 0.0
      %1313 = vmatprep.subr.mxu0 0.0
      %1314 = vmatpush1.msra.mxu0 0.0
      %1315 = vmatprep.subr.mxu0 0.0
      %1316 = vmatpush1.msra.mxu0 0.0
      %1317 = vmatprep.mubr.f32.mxu0 0.0
      %v1318 = vand.u32 %v1097, 4294901760
      %v1319 = vsub.f32 %v1097, %v1318
      %1320 = vmatmul.mubr.f32.gmra.mrb[0].mxu0 %v1319
      %v1321 = vpop.f32.mrb[0].mxu0
      %v1322 = vadd.f32 %v1248, %v1321
      %v1323 = vpop.f32.mrb[0].mxu0
      %1324 = vdwg.mxu0
      %1325 = vmatprep.subr.mxu0 0.0
      %v1326 = vand.u32 %v1093, 4294901760
      %1327 = vmatpush1.msra.mxu0 %v1326
      %1328 = vmatprep.subr.mxu0 0.0
      %1329 = vmatpush1.msra.mxu0 0.0
      %1330 = vmatprep.subr.mxu0 0.0
      %1331 = vmatpush1.msra.mxu0 0.0
      %1332 = vmatprep.subr.mxu0 0.0
      %1333 = vmatpush1.msra.mxu0 0.0
      %1334 = vmatprep.subr.mxu0 0.0
      %1335 = vmatpush1.msra.mxu0 0.0
      %1336 = vmatprep.subr.mxu0 0.0
      %1337 = vmatpush1.msra.mxu0 0.0
      %1338 = vmatprep.subr.mxu0 0.0
      %1339 = vmatpush1.msra.mxu0 0.0
      %1340 = vmatprep.subr.mxu0 0.0
      %1341 = vmatpush1.msra.mxu0 0.0
      %1342 = vmatprep.subr.mxu0 0.0
      %1343 = vmatpush1.msra.mxu0 0.0
      %1344 = vmatprep.subr.mxu0 0.0
      %1345 = vmatpush1.msra.mxu0 0.0
      %1346 = vmatprep.subr.mxu0 0.0
      %1347 = vmatpush1.msra.mxu0 0.0
      %1348 = vmatprep.subr.mxu0 0.0
      %1349 = vmatpush1.msra.mxu0 0.0
      %1350 = vmatprep.subr.mxu0 0.0
      %1351 = vmatpush1.msra.mxu0 0.0
      %1352 = vmatprep.subr.mxu0 0.0
      %1353 = vmatpush1.msra.mxu0 0.0
      %1354 = vmatprep.subr.mxu0 0.0
      %1355 = vmatpush1.msra.mxu0 0.0
      %1356 = vmatprep.subr.mxu0 0.0
      %1357 = vmatpush1.msra.mxu0 0.0
      %1358 = vmatprep.subr.mxu0 0.0
      %1359 = vmatpush1.msra.mxu0 0.0
      %1360 = vmatprep.subr.mxu0 0.0
      %1361 = vmatpush1.msra.mxu0 0.0
      %1362 = vmatprep.subr.mxu0 0.0
      %1363 = vmatpush1.msra.mxu0 0.0
      %1364 = vmatprep.subr.mxu0 0.0
      %1365 = vmatpush1.msra.mxu0 0.0
      %1366 = vmatprep.subr.mxu0 0.0
      %1367 = vmatpush1.msra.mxu0 0.0
      %1368 = vmatprep.subr.mxu0 0.0
      %1369 = vmatpush1.msra.mxu0 0.0
      %1370 = vmatprep.subr.mxu0 0.0
      %1371 = vmatpush1.msra.mxu0 0.0
      %1372 = vmatprep.subr.mxu0 0.0
      %1373 = vmatpush1.msra.mxu0 0.0
      %1374 = vmatprep.subr.mxu0 0.0
      %1375 = vmatpush1.msra.mxu0 0.0
      %1376 = vmatprep.subr.mxu0 0.0
      %1377 = vmatpush1.msra.mxu0 0.0
      %1378 = vmatprep.subr.mxu0 0.0
      %1379 = vmatpush1.msra.mxu0 0.0
      %1380 = vmatprep.subr.mxu0 0.0
      %1381 = vmatpush1.msra.mxu0 0.0
      %1382 = vmatprep.subr.mxu0 0.0
      %1383 = vmatpush1.msra.mxu0 0.0
      %1384 = vmatprep.subr.mxu0 0.0
      %1385 = vmatpush1.msra.mxu0 0.0
      %1386 = vmatprep.subr.mxu0 0.0
      %1387 = vmatpush1.msra.mxu0 0.0
      %1388 = vmatprep.subr.mxu0 0.0
      %1389 = vmatpush1.msra.mxu0 0.0
      %1390 = vmatprep.mubr.f32.mxu0 0.0
      %v1391 = vand.u32 %v1097, 4294901760
      %v1392 = vsub.f32 %v1097, %v1391
      %v1393 = vand.u32 %v1392, 4294901760
      %1394 = vmatmul.mubr.f32.gmra.mrb[0].mxu0 %v1393
      %v1395 = vpop.f32.mrb[0].mxu0
      %v1396 = vadd.f32 %v1322, %v1395
      %v1397 = vpop.f32.mrb[0].mxu0
      %1398 = vdwg.mxu0
      %1399 = vmatprep.subr.mxu0 0.0
      %v1400 = vand.u32 %v1093, 4294901760
      %v1401 = vsub.f32 %v1093, %v1400
      %v1402 = vand.u32 %v1401, 4294901760
      %1403 = vmatpush1.msra.mxu0 %v1402
      %1404 = vmatprep.subr.mxu0 0.0
      %1405 = vmatpush1.msra.mxu0 0.0
      %1406 = vmatprep.subr.mxu0 0.0
      %1407 = vmatpush1.msra.mxu0 0.0
      %1408 = vmatprep.subr.mxu0 0.0
      %1409 = vmatpush1.msra.mxu0 0.0
      %1410 = vmatprep.subr.mxu0 0.0
      %1411 = vmatpush1.msra.mxu0 0.0
      %1412 = vmatprep.subr.mxu0 0.0
      %1413 = vmatpush1.msra.mxu0 0.0
      %1414 = vmatprep.subr.mxu0 0.0
      %1415 = vmatpush1.msra.mxu0 0.0
      %1416 = vmatprep.subr.mxu0 0.0
      %1417 = vmatpush1.msra.mxu0 0.0
      %1418 = vmatprep.subr.mxu0 0.0
      %1419 = vmatpush1.msra.mxu0 0.0
      %1420 = vmatprep.subr.mxu0 0.0
      %1421 = vmatpush1.msra.mxu0 0.0
      %1422 = vmatprep.subr.mxu0 0.0
      %1423 = vmatpush1.msra.mxu0 0.0
      %1424 = vmatprep.subr.mxu0 0.0
      %1425 = vmatpush1.msra.mxu0 0.0
      %1426 = vmatprep.subr.mxu0 0.0
      %1427 = vmatpush1.msra.mxu0 0.0
      %1428 = vmatprep.subr.mxu0 0.0
      %1429 = vmatpush1.msra.mxu0 0.0
      %1430 = vmatprep.subr.mxu0 0.0
      %1431 = vmatpush1.msra.mxu0 0.0
      %1432 = vmatprep.subr.mxu0 0.0
      %1433 = vmatpush1.msra.mxu0 0.0
      %1434 = vmatprep.subr.mxu0 0.0
      %1435 = vmatpush1.msra.mxu0 0.0
      %1436 = vmatprep.subr.mxu0 0.0
      %1437 = vmatpush1.msra.mxu0 0.0
      %1438 = vmatprep.subr.mxu0 0.0
      %1439 = vmatpush1.msra.mxu0 0.0
      %1440 = vmatprep.subr.mxu0 0.0
      %1441 = vmatpush1.msra.mxu0 0.0
      %1442 = vmatprep.subr.mxu0 0.0
      %1443 = vmatpush1.msra.mxu0 0.0
      %1444 = vmatprep.subr.mxu0 0.0
      %1445 = vmatpush1.msra.mxu0 0.0
      %1446 = vmatprep.subr.mxu0 0.0
      %1447 = vmatpush1.msra.mxu0 0.0
      %1448 = vmatprep.subr.mxu0 0.0
      %1449 = vmatpush1.msra.mxu0 0.0
      %1450 = vmatprep.subr.mxu0 0.0
      %1451 = vmatpush1.msra.mxu0 0.0
      %1452 = vmatprep.subr.mxu0 0.0
      %1453 = vmatpush1.msra.mxu0 0.0
      %1454 = vmatprep.subr.mxu0 0.0
      %1455 = vmatpush1.msra.mxu0 0.0
      %1456 = vmatprep.subr.mxu0 0.0
      %1457 = vmatpush1.msra.mxu0 0.0
      %1458 = vmatprep.subr.mxu0 0.0
      %1459 = vmatpush1.msra.mxu0 0.0
      %1460 = vmatprep.subr.mxu0 0.0
      %1461 = vmatpush1.msra.mxu0 0.0
      %1462 = vmatprep.subr.mxu0 0.0
      %1463 = vmatpush1.msra.mxu0 0.0
      %1464 = vmatprep.subr.mxu0 0.0
      %1465 = vmatpush1.msra.mxu0 0.0
      %1466 = vmatprep.mubr.f32.mxu0 0.0
      %v1467 = vand.u32 %v1097, 4294901760
      %1468 = vmatmul.mubr.f32.gmra.mrb[0].mxu0 %v1467
      %v1469 = vpop.f32.mrb[0].mxu0
      %v1470 = vadd.f32 %v1396, %v1469
      %v1471 = vpop.f32.mrb[0].mxu0
      %1472 = vdwg.mxu0
      %1473 = vmatprep.subr.mxu0 0.0
      %v1474 = vand.u32 %v1093, 4294901760
      %1475 = vmatpush1.msra.mxu0 %v1474
      %1476 = vmatprep.subr.mxu0 0.0
      %1477 = vmatpush1.msra.mxu0 0.0
      %1478 = vmatprep.subr.mxu0 0.0
      %1479 = vmatpush1.msra.mxu0 0.0
      %1480 = vmatprep.subr.mxu0 0.0
      %1481 = vmatpush1.msra.mxu0 0.0
      %1482 = vmatprep.subr.mxu0 0.0
      %1483 = vmatpush1.msra.mxu0 0.0
      %1484 = vmatprep.subr.mxu0 0.0
      %1485 = vmatpush1.msra.mxu0 0.0
      %1486 = vmatprep.subr.mxu0 0.0
      %1487 = vmatpush1.msra.mxu0 0.0
      %1488 = vmatprep.subr.mxu0 0.0
      %1489 = vmatpush1.msra.mxu0 0.0
      %1490 = vmatprep.subr.mxu0 0.0
      %1491 = vmatpush1.msra.mxu0 0.0
      %1492 = vmatprep.subr.mxu0 0.0
      %1493 = vmatpush1.msra.mxu0 0.0
      %1494 = vmatprep.subr.mxu0 0.0
      %1495 = vmatpush1.msra.mxu0 0.0
      %1496 = vmatprep.subr.mxu0 0.0
      %1497 = vmatpush1.msra.mxu0 0.0
      %1498 = vmatprep.subr.mxu0 0.0
      %1499 = vmatpush1.msra.mxu0 0.0
      %1500 = vmatprep.subr.mxu0 0.0
      %1501 = vmatpush1.msra.mxu0 0.0
      %1502 = vmatprep.subr.mxu0 0.0
      %1503 = vmatpush1.msra.mxu0 0.0
      %1504 = vmatprep.subr.mxu0 0.0
      %1505 = vmatpush1.msra.mxu0 0.0
      %1506 = vmatprep.subr.mxu0 0.0
      %1507 = vmatpush1.msra.mxu0 0.0
      %1508 = vmatprep.subr.mxu0 0.0
      %1509 = vmatpush1.msra.mxu0 0.0
      %1510 = vmatprep.subr.mxu0 0.0
      %1511 = vmatpush1.msra.mxu0 0.0
      %1512 = vmatprep.subr.mxu0 0.0
      %1513 = vmatpush1.msra.mxu0 0.0
      %1514 = vmatprep.subr.mxu0 0.0
      %1515 = vmatpush1.msra.mxu0 0.0
      %1516 = vmatprep.subr.mxu0 0.0
      %1517 = vmatpush1.msra.mxu0 0.0
      %1518 = vmatprep.subr.mxu0 0.0
      %1519 = vmatpush1.msra.mxu0 0.0
      %1520 = vmatprep.subr.mxu0 0.0
      %1521 = vmatpush1.msra.mxu0 0.0
      %1522 = vmatprep.subr.mxu0 0.0
      %1523 = vmatpush1.msra.mxu0 0.0
      %1524 = vmatprep.subr.mxu0 0.0
      %1525 = vmatpush1.msra.mxu0 0.0
      %1526 = vmatprep.subr.mxu0 0.0
      %1527 = vmatpush1.msra.mxu0 0.0
      %1528 = vmatprep.subr.mxu0 0.0
      %1529 = vmatpush1.msra.mxu0 0.0
      %1530 = vmatprep.subr.mxu0 0.0
      %1531 = vmatpush1.msra.mxu0 0.0
      %1532 = vmatprep.subr.mxu0 0.0
      %1533 = vmatpush1.msra.mxu0 0.0
      %1534 = vmatprep.subr.mxu0 0.0
      %1535 = vmatpush1.msra.mxu0 0.0
      %1536 = vmatprep.subr.mxu0 0.0
      %1537 = vmatpush1.msra.mxu0 0.0
      %1538 = vmatprep.mubr.f32.mxu0 0.0
      %v1539 = vand.u32 %v1097, 4294901760
      %1540 = vmatmul.mubr.f32.gmra.mrb[0].mxu0 %v1539
      %v1541 = vpop.f32.mrb[0].mxu0
      %v1542 = vadd.f32 %v1470, %v1541
      %v1543 = vpop.f32.mrb[0].mxu0
      %1544 = vdwg.mxu0
      %v1545 = vxor.u32 %v1542, 2147483648
      %v1546 = vmul.f32 %v1545, 1.442695
      %v1547 = vpow.pop %v1546
      %v1548 = vadd.f32 %v1547, 1.0
      %v1549 = vrcp.pop %v1548
      %v1550 = vmul.f32 1.0, %v1549
      %v1551 = vlaneseq
      %v1552 = vshrl.u32 %v1551, 7
      %v1553 = vsub.s32 0, %v1552
      %v1554 = vrot.slane %v1550, %v1553
      %1556 = vbcast.lane.b32.xlu0 %v1554, 256
      %v1557 = vpop.permute.xlu0 %1556
      %s1559 = sor.u32 256, 8
      %1560 = vbcast.lane.b32.xlu0 %v1554, %s1559
      %v1561 = vpop.permute.xlu0 %1560
      %s1563 = sor.u32 256, 16
      %1564 = vbcast.lane.b32.xlu0 %v1554, %s1563
      %v1565 = vpop.permute.xlu0 %1564
      %s1567 = sor.u32 256, 24
      %1568 = vbcast.lane.b32.xlu0 %v1554, %s1567
      %v1569 = vpop.permute.xlu0 %1568
      %s1571 = sor.u32 256, 32
      %1572 = vbcast.lane.b32.xlu0 %v1554, %s1571
      %v1573 = vpop.permute.xlu0 %1572
      %s1575 = sor.u32 256, 40
      %1576 = vbcast.lane.b32.xlu0 %v1554, %s1575
      %v1577 = vpop.permute.xlu0 %1576
      %s1579 = sor.u32 256, 48
      %1580 = vbcast.lane.b32.xlu0 %v1554, %s1579
      %v1581 = vpop.permute.xlu0 %1580
      %s1583 = sor.u32 256, 56
      %1584 = vbcast.lane.b32.xlu0 %v1554, %s1583
      %v1585 = vpop.permute.xlu0 %1584
      %s1587 = sor.u32 256, 64
      %1588 = vbcast.lane.b32.xlu0 %v1554, %s1587
      %v1589 = vpop.permute.xlu0 %1588
      %s1591 = sor.u32 256, 72
      %1592 = vbcast.lane.b32.xlu0 %v1554, %s1591
      %v1593 = vpop.permute.xlu0 %1592
      %s1595 = sor.u32 256, 80
      %1596 = vbcast.lane.b32.xlu0 %v1554, %s1595
      %v1597 = vpop.permute.xlu0 %1596
      %s1599 = sor.u32 256, 88
      %1600 = vbcast.lane.b32.xlu0 %v1554, %s1599
      %v1601 = vpop.permute.xlu0 %1600
      %s1603 = sor.u32 256, 96
      %1604 = vbcast.lane.b32.xlu0 %v1554, %s1603
      %v1605 = vpop.permute.xlu0 %1604
      %s1607 = sor.u32 256, 104
      %1608 = vbcast.lane.b32.xlu0 %v1554, %s1607
      %v1609 = vpop.permute.xlu0 %1608
      %s1611 = sor.u32 256, 112
      %1612 = vbcast.lane.b32.xlu0 %v1554, %s1611
      %v1613 = vpop.permute.xlu0 %1612
      %s1615 = sor.u32 256, 120
      %1616 = vbcast.lane.b32.xlu0 %v1554, %s1615
      %v1617 = vpop.permute.xlu0 %1616
      %v1618 = vmul.f32 %v225, %v1557
      %v1619 = vmul.f32 %v226, %v1561
      %v1620 = vmul.f32 %v227, %v1565
      %v1621 = vmul.f32 %v228, %v1569
      %v1622 = vmul.f32 %v229, %v1573
      %v1623 = vmul.f32 %v230, %v1577
      %v1624 = vmul.f32 %v231, %v1581
      %v1625 = vmul.f32 %v232, %v1585
      %v1626 = vmul.f32 %v233, %v1589
      %v1627 = vmul.f32 %v234, %v1593
      %v1628 = vmul.f32 %v235, %v1597
      %v1629 = vmul.f32 %v236, %v1601
      %v1630 = vmul.f32 %v237, %v1605
      %v1631 = vmul.f32 %v238, %v1609
      %v1632 = vmul.f32 %v239, %v1613
      %v1633 = vmul.f32 %v240, %v1617
      %1634 = vst.msk [vmem:[%s224] sm:$0xff] %vm241, %v1618
      %1635 = vst.msk [vmem:[%s224 + $0x8] sm:$0xff] %vm241, %v1619
      %1636 = vst.msk [vmem:[%s224 + $0x10] sm:$0xff] %vm241, %v1620
      %1637 = vst.msk [vmem:[%s224 + $0x18] sm:$0xff] %vm241, %v1621
      %1638 = vst.msk [vmem:[%s224 + $0x20] sm:$0xff] %vm241, %v1622
      %1639 = vst.msk [vmem:[%s224 + $0x28] sm:$0xff] %vm241, %v1623
      %1640 = vst.msk [vmem:[%s224 + $0x30] sm:$0xff] %vm241, %v1624
      %1641 = vst.msk [vmem:[%s224 + $0x38] sm:$0xff] %vm241, %v1625
      %1642 = vst.msk [vmem:[%s224 + $0x40] sm:$0xff] %vm241, %v1626
      %1643 = vst.msk [vmem:[%s224 + $0x48] sm:$0xff] %vm241, %v1627
      %1644 = vst.msk [vmem:[%s224 + $0x50] sm:$0xff] %vm241, %v1628
      %1645 = vst.msk [vmem:[%s224 + $0x58] sm:$0xff] %vm241, %v1629
      %1646 = vst.msk [vmem:[%s224 + $0x60] sm:$0xff] %vm241, %v1630
      %1647 = vst.msk [vmem:[%s224 + $0x68] sm:$0xff] %vm241, %v1631
      %1648 = vst.msk [vmem:[%s224 + $0x70] sm:$0xff] %vm241, %v1632
      %1649 = vst.msk [vmem:[%s224 + $0x78] sm:$0xff] %vm241, %v1633
      %p1650 = scmp.lt.s32.totalorder %s16, 1
      %s1651 = scalar_select %p1650, %s16, 1
      %s1652 = smul.addr %s1651, 16
      %s1653 = smul.addr %s1652, 8
      %s1654 = scalar_lea.vmem %s5, %s1653
      // Predicated region
      $region41: #{se_module.1} parent=39 // pred_check
        %p1655 = pneg %p144
      $region42: #{se_module.1} parent=39 // pred_check_branch
        %1657 = sbr.rel (%p1655) target = $region44
      $region43: #{se_module.1} parent=39 // pred_region
        _
      $region44: #{se_module.1} parent=39 // pred_fallthru
        _
    $region40: #{se_module.1} parent=5 // pred_fallthru
      _
    %p1658 = scmp.le.s32.totalorder 2, %s11
    // Predicated region
    $region45: #{se_module.1} parent=5 // pred_check
      %p1659 = pneg %p1658
    $region46: #{se_module.1} parent=5 // pred_check_branch
      %1661 = sbr.rel (%p1659) target = $region48
    $region47: #{se_module.1} parent=5 // pred_region
      %s1662 = ssub.s32 %s11, 2
      // Predicated region
      $region49: #{se_module.1} parent=47 // pred_check
        %p1663 = pneg %p150
      $region50: #{se_module.1} parent=47 // pred_check_branch
        %1665 = sbr.rel (%p1663) target = $region52
      $region51: #{se_module.1} parent=47 // pred_region
        %p1666 = scmp.lt.s32.totalorder %s17, 1
        %s1667 = scalar_select %p1666, %s17, 1
        %s1668 = smul.addr %s1667, 16
        %s1669 = smul.addr %s1668, 8
        %s1670 = scalar_lea.vmem %s5, %s1669
      $region52: #{se_module.1} parent=47 // pred_fallthru
        _
    $region48: #{se_module.1} parent=5 // pred_fallthru
      _
  $region6: #{se_module.1} parent=0 // loop_footer
    %s15 = sadd.s32 1, %s11
  $region7: #{se_module.1} parent=0 // loop_footer_branch
    %10 = sbr.rel target = $region3
  $region8: #{se_module.1} parent=0 // loop_exit
    _

</llo_original>
